<compile_context>
chip_gen: v5e
topology: v5e:2x2
jax: 0.10.0
libtpu: 0.0.40
codegen_flags: <defaults>
</compile_context>

<pallas_src>
import functools

import jax
import jax.numpy as jnp
import numpy as np
from jax.experimental import pallas as pl
from jax.experimental.pallas import tpu as pltpu  # noqa: F401


# ----------------------------------------------------------------------------
# Fused Pallas kernel: n_layers stacked LSTMs + Linear head
# ----------------------------------------------------------------------------
def make_fused_rnn_kernel(n_layers, T, B, H):
    def kernel(*refs):
        x_ref, h0_ref, c0_ref = refs[0], refs[1], refs[2]
        wih_refs = [refs[3 + 3 * l + 0] for l in range(n_layers)]
        whh_refs = [refs[3 + 3 * l + 1] for l in range(n_layers)]
        b_refs = [refs[3 + 3 * l + 2] for l in range(n_layers)]
        fcw_ref = refs[3 + 3 * n_layers]
        fcb_ref = refs[4 + 3 * n_layers]
        out_ref = refs[5 + 3 * n_layers]
        hN_ref = refs[6 + 3 * n_layers]
        cN_ref = refs[7 + 3 * n_layers]

        # Hoisted lane mask selecting the "g" gate block (PyTorch order i,f,g,o).
        lane = jax.lax.broadcasted_iota(jnp.int32, (B, 4 * H), 1)
        g_lanes = (lane >= 2 * H) & (lane < 3 * H)

        hs = None  # per-timestep hidden outputs of the current layer (values)
        for l in range(n_layers):
            wih = wih_refs[l][...]          # (Din_l, 4H) == W_ih^T
            whh = whh_refs[l][...]          # (H,    4H) == W_hh^T
            b = b_refs[l][...]              # (1,    4H) == b_ih + b_hh

            # Batched input projection for ALL timesteps (off the recurrence
            # chain): one lane/sublane-dense MXU matmul per layer.
            if l == 0:
                layer_in = x_ref[...]                     # (T*B, Din), time-major
            else:
                layer_in = jnp.concatenate(hs, axis=0)    # (T*B, H),   time-major
            pre = jnp.dot(layer_in, wih,
                          preferred_element_type=jnp.float32) + b   # (T*B, 4H)

            h = h0_ref[l]                   # (B, H)
            c = c0_ref[l]                   # (B, H)
            outs = []
            for t in range(T):              # fully unrolled; h/c live in vregs
                gates = pre[t * B:(t + 1) * B, :] + jnp.dot(
                    h, whh, preferred_element_type=jnp.float32)      # (B, 4H)
                # One sigmoid + one tanh over the full gate row, lane-select g.
                act = jnp.where(g_lanes, jnp.tanh(gates),
                                jax.nn.sigmoid(gates))
                i_g = act[:, 0 * H:1 * H]
                f_g = act[:, 1 * H:2 * H]
                g_g = act[:, 2 * H:3 * H]
                o_g = act[:, 3 * H:4 * H]
                c = f_g * c + i_g * g_g
                h = o_g * jnp.tanh(c)
                outs.append(h)

            hN_ref[l] = h                   # final states written once per layer
            cN_ref[l] = c
            hs = outs

        # Final Linear over the whole sequence. Rows ordered batch-major
        # (row = b*T + t) to match torch batch_first lstm_out.view(-1, H) @ fc.
        lstm_out = jnp.stack(hs, axis=1).reshape(B * T, H)           # (B*T, H)
        out_ref[...] = jnp.dot(lstm_out, fcw_ref[...],
                               preferred_element_type=jnp.float32) + fcb_ref[...]

    return kernel


# ----------------------------------------------------------------------------
# Wrappers
# ----------------------------------------------------------------------------
def _full_spec(shape):
    nd = len(shape)
    if nd == 2:
        return pl.BlockSpec(shape, lambda: (0, 0))
    assert nd == 3
    return pl.BlockSpec(shape, lambda: (0, 0, 0))


def prepare_params(params, n_layers):
    """One-time re-layout of torch-style LSTM/Linear params (outside jit)."""
    kp = {}
    for l in range(n_layers):
        kp[f"wih_{l}"] = jnp.transpose(params[f"w_ih_{l}"])          # (Din_l, 4H)
        kp[f"whh_{l}"] = jnp.transpose(params[f"w_hh_{l}"])          # (H, 4H)
        kp[f"b_{l}"] = (params[f"b_ih_{l}"] +
                        params[f"b_hh_{l}"]).reshape(1, -1)          # (1, 4H)
    kp["fc_w"] = jnp.transpose(params["fc_w"])                       # (H, Dout)
    kp["fc_b"] = params["fc_b"].reshape(1, -1)                       # (1, Dout)
    return kp


def rnn_forward(x, hidden, kparams, n_layers, hidden_dim):
    """Equivalent of RNN.forward(x, hidden).

    x: (B, T, input_dim); hidden = (h0, c0), each (n_layers, B, hidden_dim).
    Returns (fc_out (B*T, input_dim), (hN, cN)).
    """
    h0, c0 = hidden
    B, T, Din = x.shape
    H = hidden_dim
    L = n_layers
    Dout = kparams["fc_w"].shape[1]

    # Time-major flat input: each timestep is a contiguous (B, Din) slab and
    # the per-layer input projection becomes a single dense matmul.
    x_tm = jnp.transpose(x, (1, 0, 2)).reshape(T * B, Din)

    in_arrays = [x_tm, h0, c0]
    in_specs = [_full_spec((T * B, Din)),
                _full_spec((L, B, H)),
                _full_spec((L, B, H))]
    for l in range(L):
        din_l = Din if l == 0 else H
        in_arrays += [kparams[f"wih_{l}"], kparams[f"whh_{l}"], kparams[f"b_{l}"]]
        in_specs += [_full_spec((din_l, 4 * H)),
                     _full_spec((H, 4 * H)),
                     _full_spec((1, 4 * H))]
    in_arrays += [kparams["fc_w"], kparams["fc_b"]]
    in_specs += [_full_spec((H, Dout)), _full_spec((1, Dout))]

    out, hN, cN = pl.pallas_call(
        make_fused_rnn_kernel(L, T, B, H),
        out_shape=(jax.ShapeDtypeStruct((B * T, Dout), jnp.float32),
                   jax.ShapeDtypeStruct((L, B, H), jnp.float32),
                   jax.ShapeDtypeStruct((L, B, H), jnp.float32)),
        in_specs=in_specs,
        out_specs=(_full_spec((B * T, Dout)),
                   _full_spec((L, B, H)),
                   _full_spec((L, B, H))),
    )(*in_arrays)
    return out, (hN, cN)


# ----------------------------------------------------------------------------
# Pure-JAX reference (for correctness check)
# ----------------------------------------------------------------------------
def rnn_forward_ref(x, hidden, params, n_layers, hidden_dim):
    h0, c0 = hidden
    inp = x
    h_finals, c_finals = [], []
    for l in range(n_layers):
        w_ih, w_hh = params[f"w_ih_{l}"], params[f"w_hh_{l}"]
        b = params[f"b_ih_{l}"] + params[f"b_hh_{l}"]
        h, c = h0[l], c0[l]
        ys = []
        for t in range(inp.shape[1]):
            gates = inp[:, t, :] @ w_ih.T + h @ w_hh.T + b
            i_g, f_g, g_g, o_g = jnp.split(gates, 4, axis=-1)
            c = jax.nn.sigmoid(f_g) * c + jax.nn.sigmoid(i_g) * jnp.tanh(g_g)
            h = jax.nn.sigmoid(o_g) * jnp.tanh(c)
            ys.append(h)
        inp = jnp.stack(ys, axis=1)
        h_finals.append(h)
        c_finals.append(c)
    lstm_out = inp.reshape(-1, hidden_dim)
    out = lstm_out @ params["fc_w"].T + params["fc_b"]
    return out, (jnp.stack(h_finals), jnp.stack(c_finals))


# ----------------------------------------------------------------------------
# Main
# ----------------------------------------------------------------------------
if __name__ == "__main__":
    input_dim, hidden_dim, n_layers, batch_size, seq_len = 16, 32, 2, 2, 8

    key = jax.random.PRNGKey(0)
    keys = jax.random.split(key, 4 * n_layers + 3)
    k = 1.0 / np.sqrt(hidden_dim)

    params = {}
    for l in range(n_layers):
        din = input_dim if l == 0 else hidden_dim
        params[f"w_ih_{l}"] = jax.random.uniform(
            keys[4 * l + 0], (4 * hidden_dim, din), jnp.float32, -k, k)
        params[f"w_hh_{l}"] = jax.random.uniform(
            keys[4 * l + 1], (4 * hidden_dim, hidden_dim), jnp.float32, -k, k)
        params[f"b_ih_{l}"] = jax.random.uniform(
            keys[4 * l + 2], (4 * hidden_dim,), jnp.float32, -k, k)
        params[f"b_hh_{l}"] = jax.random.uniform(
            keys[4 * l + 3], (4 * hidden_dim,), jnp.float32, -k, k)
    params["fc_w"] = jax.random.uniform(
        keys[-3], (input_dim, hidden_dim), jnp.float32, -k, k)
    params["fc_b"] = jax.random.uniform(
        keys[-2], (input_dim,), jnp.float32, -k, k)

    x = jax.random.normal(keys[-1], (batch_size, seq_len, input_dim),
                          jnp.float32)
    hidden = (jnp.zeros((n_layers, batch_size, hidden_dim), jnp.float32),
              jnp.zeros((n_layers, batch_size, hidden_dim), jnp.float32))

    # One-time weight re-layout (outside jit / forward).
    kparams = prepare_params(params, n_layers)

    fwd = jax.jit(functools.partial(rnn_forward, n_layers=n_layers,
                                    hidden_dim=hidden_dim))
    out, (hN, cN) = fwd(x, hidden, kparams)
    jax.block_until_ready((out, hN, cN))

    out_ref, (hN_ref, cN_ref) = rnn_forward_ref(x, hidden, params,
                                                n_layers, hidden_dim)
    np.testing.assert_allclose(np.asarray(out), np.asarray(out_ref),
                               rtol=1e-4, atol=1e-4)
    np.testing.assert_allclose(np.asarray(hN), np.asarray(hN_ref),
                               rtol=1e-4, atol=1e-4)
    np.testing.assert_allclose(np.asarray(cN), np.asarray(cN_ref),
                               rtol=1e-4, atol=1e-4)

    assert out.shape == (batch_size * seq_len, input_dim)
    print("KERNEL_OK")
</pallas_src>

<mosaic_0001>
module attributes {stable_mosaic.version = 11 : i64} {
  func.func @kernel(%arg0: memref<16x16xf32, #tpu.memory_space<vmem>>, %arg1: memref<2x2x32xf32, #tpu.memory_space<vmem>>, %arg2: memref<2x2x32xf32, #tpu.memory_space<vmem>>, %arg3: memref<16x128xf32, #tpu.memory_space<vmem>>, %arg4: memref<32x128xf32, #tpu.memory_space<vmem>>, %arg5: memref<1x128xf32, #tpu.memory_space<vmem>>, %arg6: memref<32x128xf32, #tpu.memory_space<vmem>>, %arg7: memref<32x128xf32, #tpu.memory_space<vmem>>, %arg8: memref<1x128xf32, #tpu.memory_space<vmem>>, %arg9: memref<32x16xf32, #tpu.memory_space<vmem>>, %arg10: memref<1x16xf32, #tpu.memory_space<vmem>>, %arg11: memref<16x16xf32, #tpu.memory_space<vmem>>, %arg12: memref<2x2x32xf32, #tpu.memory_space<vmem>>, %arg13: memref<2x2x32xf32, #tpu.memory_space<vmem>>) attributes {dimension_semantics = [], scalar_prefetch = 0 : i64, scratch_operands = 0 : i64, tpu.core_type = #tpu.core_type<tc>} {
    %0 = tpu.iota {dimensions = array<i32: 1>} : vector<2x128xi32>
    %c64_i32 = arith.constant 64 : i32
    %1 = vector.broadcast %c64_i32 : i32 to vector<2x128xi32>
    %2 = arith.cmpi sge, %0, %1 : vector<2x128xi32>
    %c96_i32 = arith.constant 96 : i32
    %3 = vector.broadcast %c96_i32 : i32 to vector<2x128xi32>
    %4 = arith.cmpi slt, %0, %3 : vector<2x128xi32>
    %5 = arith.andi %2, %4 : vector<2x128xi1>
    %c0 = arith.constant 0 : index
    %c0_0 = arith.constant 0 : index
    %6 = vector.load %arg3[%c0, %c0_0] : memref<16x128xf32, #tpu.memory_space<vmem>>, vector<16x128xf32>
    %c0_1 = arith.constant 0 : index
    %c0_2 = arith.constant 0 : index
    %7 = vector.load %arg4[%c0_1, %c0_2] : memref<32x128xf32, #tpu.memory_space<vmem>>, vector<32x128xf32>
    %c0_3 = arith.constant 0 : index
    %c0_4 = arith.constant 0 : index
    %8 = vector.load %arg5[%c0_3, %c0_4] : memref<1x128xf32, #tpu.memory_space<vmem>>, vector<1x128xf32>
    %c0_5 = arith.constant 0 : index
    %c0_6 = arith.constant 0 : index
    %9 = vector.load %arg0[%c0_5, %c0_6] : memref<16x16xf32, #tpu.memory_space<vmem>>, vector<16x16xf32>
    %cst = arith.constant dense<0.000000e+00> : vector<16x128xf32>
    %10 = tpu.matmul %9, %6, %cst {dimension_numbers = #tpu.dot_dimension_numbers<[1], [0], [0], [1], [0, 0, 1, 1], [], []>} : vector<16x16xf32>, vector<16x128xf32>, vector<16x128xf32> -> vector<16x128xf32>
    %11 = vector.broadcast %8 : vector<1x128xf32> to vector<16x128xf32>
    %12 = arith.addf %10, %11 : vector<16x128xf32>
    %c0_7 = arith.constant 0 : index
    %c0_8 = arith.constant 0 : index
    %c0_9 = arith.constant 0 : index
    %13 = vector.load %arg1[%c0_7, %c0_8, %c0_9] : memref<2x2x32xf32, #tpu.memory_space<vmem>>, vector<1x2x32xf32>
    %14 = vector.shape_cast %13 : vector<1x2x32xf32> to vector<2x32xf32>
    %c0_10 = arith.constant 0 : index
    %c0_11 = arith.constant 0 : index
    %c0_12 = arith.constant 0 : index
    %15 = vector.load %arg2[%c0_10, %c0_11, %c0_12] : memref<2x2x32xf32, #tpu.memory_space<vmem>>, vector<1x2x32xf32>
    %16 = vector.shape_cast %15 : vector<1x2x32xf32> to vector<2x32xf32>
    %17 = vector.extract_strided_slice %12 {offsets = [0, 0], sizes = [2, 128], strides = [1, 1]} : vector<16x128xf32> to vector<2x128xf32>
    %cst_13 = arith.constant dense<0.000000e+00> : vector<2x128xf32>
    %18 = tpu.matmul %14, %7, %cst_13 {dimension_numbers = #tpu.dot_dimension_numbers<[1], [0], [0], [1], [0, 0, 1, 1], [], []>} : vector<2x32xf32>, vector<32x128xf32>, vector<2x128xf32> -> vector<2x128xf32>
    %19 = arith.addf %17, %18 : vector<2x128xf32>
    %20 = math.tanh %19 : vector<2x128xf32>
    %21 = arith.negf %19 : vector<2x128xf32>
    %22 = math.exp %21 : vector<2x128xf32>
    %cst_14 = arith.constant 1.000000e+00 : f32
    %23 = vector.broadcast %cst_14 : f32 to vector<2x128xf32>
    %24 = arith.addf %23, %22 : vector<2x128xf32>
    %25 = arith.divf %23, %24 : vector<2x128xf32>
    %26 = arith.select %5, %20, %25 : vector<2x128xi1>, vector<2x128xf32>
    %27 = vector.extract_strided_slice %26 {offsets = [0, 0], sizes = [2, 32], strides = [1, 1]} : vector<2x128xf32> to vector<2x32xf32>
    %28 = vector.extract_strided_slice %26 {offsets = [0, 32], sizes = [2, 32], strides = [1, 1]} : vector<2x128xf32> to vector<2x32xf32>
    %29 = vector.extract_strided_slice %26 {offsets = [0, 64], sizes = [2, 32], strides = [1, 1]} : vector<2x128xf32> to vector<2x32xf32>
    %30 = vector.extract_strided_slice %26 {offsets = [0, 96], sizes = [2, 32], strides = [1, 1]} : vector<2x128xf32> to vector<2x32xf32>
    %31 = arith.mulf %28, %16 : vector<2x32xf32>
    %32 = arith.mulf %27, %29 : vector<2x32xf32>
    %33 = arith.addf %31, %32 : vector<2x32xf32>
    %34 = math.tanh %33 : vector<2x32xf32>
    %35 = arith.mulf %30, %34 : vector<2x32xf32>
    %36 = vector.extract_strided_slice %12 {offsets = [2, 0], sizes = [2, 128], strides = [1, 1]} : vector<16x128xf32> to vector<2x128xf32>
    %cst_15 = arith.constant dense<0.000000e+00> : vector<2x128xf32>
    %37 = tpu.matmul %35, %7, %cst_15 {dimension_numbers = #tpu.dot_dimension_numbers<[1], [0], [0], [1], [0, 0, 1, 1], [], []>} : vector<2x32xf32>, vector<32x128xf32>, vector<2x128xf32> -> vector<2x128xf32>
    %38 = arith.addf %36, %37 : vector<2x128xf32>
    %39 = math.tanh %38 : vector<2x128xf32>
    %40 = arith.negf %38 : vector<2x128xf32>
    %41 = math.exp %40 : vector<2x128xf32>
    %cst_16 = arith.constant 1.000000e+00 : f32
    %42 = vector.broadcast %cst_16 : f32 to vector<2x128xf32>
    %43 = arith.addf %42, %41 : vector<2x128xf32>
    %44 = arith.divf %42, %43 : vector<2x128xf32>
    %45 = arith.select %5, %39, %44 : vector<2x128xi1>, vector<2x128xf32>
    %46 = vector.extract_strided_slice %45 {offsets = [0, 0], sizes = [2, 32], strides = [1, 1]} : vector<2x128xf32> to vector<2x32xf32>
    %47 = vector.extract_strided_slice %45 {offsets = [0, 32], sizes = [2, 32], strides = [1, 1]} : vector<2x128xf32> to vector<2x32xf32>
    %48 = vector.extract_strided_slice %45 {offsets = [0, 64], sizes = [2, 32], strides = [1, 1]} : vector<2x128xf32> to vector<2x32xf32>
    %49 = vector.extract_strided_slice %45 {offsets = [0, 96], sizes = [2, 32], strides = [1, 1]} : vector<2x128xf32> to vector<2x32xf32>
    %50 = arith.mulf %47, %33 : vector<2x32xf32>
    %51 = arith.mulf %46, %48 : vector<2x32xf32>
    %52 = arith.addf %50, %51 : vector<2x32xf32>
    %53 = math.tanh %52 : vector<2x32xf32>
    %54 = arith.mulf %49, %53 : vector<2x32xf32>
    %55 = vector.extract_strided_slice %12 {offsets = [4, 0], sizes = [2, 128], strides = [1, 1]} : vector<16x128xf32> to vector<2x128xf32>
    %cst_17 = arith.constant dense<0.000000e+00> : vector<2x128xf32>
    %56 = tpu.matmul %54, %7, %cst_17 {dimension_numbers = #tpu.dot_dimension_numbers<[1], [0], [0], [1], [0, 0, 1, 1], [], []>} : vector<2x32xf32>, vector<32x128xf32>, vector<2x128xf32> -> vector<2x128xf32>
    %57 = arith.addf %55, %56 : vector<2x128xf32>
    %58 = math.tanh %57 : vector<2x128xf32>
    %59 = arith.negf %57 : vector<2x128xf32>
    %60 = math.exp %59 : vector<2x128xf32>
    %cst_18 = arith.constant 1.000000e+00 : f32
    %61 = vector.broadcast %cst_18 : f32 to vector<2x128xf32>
    %62 = arith.addf %61, %60 : vector<2x128xf32>
    %63 = arith.divf %61, %62 : vector<2x128xf32>
    %64 = arith.select %5, %58, %63 : vector<2x128xi1>, vector<2x128xf32>
    %65 = vector.extract_strided_slice %64 {offsets = [0, 0], sizes = [2, 32], strides = [1, 1]} : vector<2x128xf32> to vector<2x32xf32>
    %66 = vector.extract_strided_slice %64 {offsets = [0, 32], sizes = [2, 32], strides = [1, 1]} : vector<2x128xf32> to vector<2x32xf32>
    %67 = vector.extract_strided_slice %64 {offsets = [0, 64], sizes = [2, 32], strides = [1, 1]} : vector<2x128xf32> to vector<2x32xf32>
    %68 = vector.extract_strided_slice %64 {offsets = [0, 96], sizes = [2, 32], strides = [1, 1]} : vector<2x128xf32> to vector<2x32xf32>
    %69 = arith.mulf %66, %52 : vector<2x32xf32>
    %70 = arith.mulf %65, %67 : vector<2x32xf32>
    %71 = arith.addf %69, %70 : vector<2x32xf32>
    %72 = math.tanh %71 : vector<2x32xf32>
    %73 = arith.mulf %68, %72 : vector<2x32xf32>
    %74 = vector.extract_strided_slice %12 {offsets = [6, 0], sizes = [2, 128], strides = [1, 1]} : vector<16x128xf32> to vector<2x128xf32>
    %cst_19 = arith.constant dense<0.000000e+00> : vector<2x128xf32>
    %75 = tpu.matmul %73, %7, %cst_19 {dimension_numbers = #tpu.dot_dimension_numbers<[1], [0], [0], [1], [0, 0, 1, 1], [], []>} : vector<2x32xf32>, vector<32x128xf32>, vector<2x128xf32> -> vector<2x128xf32>
    %76 = arith.addf %74, %75 : vector<2x128xf32>
    %77 = math.tanh %76 : vector<2x128xf32>
    %78 = arith.negf %76 : vector<2x128xf32>
    %79 = math.exp %78 : vector<2x128xf32>
    %cst_20 = arith.constant 1.000000e+00 : f32
    %80 = vector.broadcast %cst_20 : f32 to vector<2x128xf32>
    %81 = arith.addf %80, %79 : vector<2x128xf32>
    %82 = arith.divf %80, %81 : vector<2x128xf32>
    %83 = arith.select %5, %77, %82 : vector<2x128xi1>, vector<2x128xf32>
    %84 = vector.extract_strided_slice %83 {offsets = [0, 0], sizes = [2, 32], strides = [1, 1]} : vector<2x128xf32> to vector<2x32xf32>
    %85 = vector.extract_strided_slice %83 {offsets = [0, 32], sizes = [2, 32], strides = [1, 1]} : vector<2x128xf32> to vector<2x32xf32>
    %86 = vector.extract_strided_slice %83 {offsets = [0, 64], sizes = [2, 32], strides = [1, 1]} : vector<2x128xf32> to vector<2x32xf32>
    %87 = vector.extract_strided_slice %83 {offsets = [0, 96], sizes = [2, 32], strides = [1, 1]} : vector<2x128xf32> to vector<2x32xf32>
    %88 = arith.mulf %85, %71 : vector<2x32xf32>
    %89 = arith.mulf %84, %86 : vector<2x32xf32>
    %90 = arith.addf %88, %89 : vector<2x32xf32>
    %91 = math.tanh %90 : vector<2x32xf32>
    %92 = arith.mulf %87, %91 : vector<2x32xf32>
    %93 = vector.extract_strided_slice %12 {offsets = [8, 0], sizes = [2, 128], strides = [1, 1]} : vector<16x128xf32> to vector<2x128xf32>
    %cst_21 = arith.constant dense<0.000000e+00> : vector<2x128xf32>
    %94 = tpu.matmul %92, %7, %cst_21 {dimension_numbers = #tpu.dot_dimension_numbers<[1], [0], [0], [1], [0, 0, 1, 1], [], []>} : vector<2x32xf32>, vector<32x128xf32>, vector<2x128xf32> -> vector<2x128xf32>
    %95 = arith.addf %93, %94 : vector<2x128xf32>
    %96 = math.tanh %95 : vector<2x128xf32>
    %97 = arith.negf %95 : vector<2x128xf32>
    %98 = math.exp %97 : vector<2x128xf32>
    %cst_22 = arith.constant 1.000000e+00 : f32
    %99 = vector.broadcast %cst_22 : f32 to vector<2x128xf32>
    %100 = arith.addf %99, %98 : vector<2x128xf32>
    %101 = arith.divf %99, %100 : vector<2x128xf32>
    %102 = arith.select %5, %96, %101 : vector<2x128xi1>, vector<2x128xf32>
    %103 = vector.extract_strided_slice %102 {offsets = [0, 0], sizes = [2, 32], strides = [1, 1]} : vector<2x128xf32> to vector<2x32xf32>
    %104 = vector.extract_strided_slice %102 {offsets = [0, 32], sizes = [2, 32], strides = [1, 1]} : vector<2x128xf32> to vector<2x32xf32>
    %105 = vector.extract_strided_slice %102 {offsets = [0, 64], sizes = [2, 32], strides = [1, 1]} : vector<2x128xf32> to vector<2x32xf32>
    %106 = vector.extract_strided_slice %102 {offsets = [0, 96], sizes = [2, 32], strides = [1, 1]} : vector<2x128xf32> to vector<2x32xf32>
    %107 = arith.mulf %104, %90 : vector<2x32xf32>
    %108 = arith.mulf %103, %105 : vector<2x32xf32>
    %109 = arith.addf %107, %108 : vector<2x32xf32>
    %110 = math.tanh %109 : vector<2x32xf32>
    %111 = arith.mulf %106, %110 : vector<2x32xf32>
    %112 = vector.extract_strided_slice %12 {offsets = [10, 0], sizes = [2, 128], strides = [1, 1]} : vector<16x128xf32> to vector<2x128xf32>
    %cst_23 = arith.constant dense<0.000000e+00> : vector<2x128xf32>
    %113 = tpu.matmul %111, %7, %cst_23 {dimension_numbers = #tpu.dot_dimension_numbers<[1], [0], [0], [1], [0, 0, 1, 1], [], []>} : vector<2x32xf32>, vector<32x128xf32>, vector<2x128xf32> -> vector<2x128xf32>
    %114 = arith.addf %112, %113 : vector<2x128xf32>
    %115 = math.tanh %114 : vector<2x128xf32>
    %116 = arith.negf %114 : vector<2x128xf32>
    %117 = math.exp %116 : vector<2x128xf32>
    %cst_24 = arith.constant 1.000000e+00 : f32
    %118 = vector.broadcast %cst_24 : f32 to vector<2x128xf32>
    %119 = arith.addf %118, %117 : vector<2x128xf32>
    %120 = arith.divf %118, %119 : vector<2x128xf32>
    %121 = arith.select %5, %115, %120 : vector<2x128xi1>, vector<2x128xf32>
    %122 = vector.extract_strided_slice %121 {offsets = [0, 0], sizes = [2, 32], strides = [1, 1]} : vector<2x128xf32> to vector<2x32xf32>
    %123 = vector.extract_strided_slice %121 {offsets = [0, 32], sizes = [2, 32], strides = [1, 1]} : vector<2x128xf32> to vector<2x32xf32>
    %124 = vector.extract_strided_slice %121 {offsets = [0, 64], sizes = [2, 32], strides = [1, 1]} : vector<2x128xf32> to vector<2x32xf32>
    %125 = vector.extract_strided_slice %121 {offsets = [0, 96], sizes = [2, 32], strides = [1, 1]} : vector<2x128xf32> to vector<2x32xf32>
    %126 = arith.mulf %123, %109 : vector<2x32xf32>
    %127 = arith.mulf %122, %124 : vector<2x32xf32>
    %128 = arith.addf %126, %127 : vector<2x32xf32>
    %129 = math.tanh %128 : vector<2x32xf32>
    %130 = arith.mulf %125, %129 : vector<2x32xf32>
    %131 = vector.extract_strided_slice %12 {offsets = [12, 0], sizes = [2, 128], strides = [1, 1]} : vector<16x128xf32> to vector<2x128xf32>
    %cst_25 = arith.constant dense<0.000000e+00> : vector<2x128xf32>
    %132 = tpu.matmul %130, %7, %cst_25 {dimension_numbers = #tpu.dot_dimension_numbers<[1], [0], [0], [1], [0, 0, 1, 1], [], []>} : vector<2x32xf32>, vector<32x128xf32>, vector<2x128xf32> -> vector<2x128xf32>
    %133 = arith.addf %131, %132 : vector<2x128xf32>
    %134 = math.tanh %133 : vector<2x128xf32>
    %135 = arith.negf %133 : vector<2x128xf32>
    %136 = math.exp %135 : vector<2x128xf32>
    %cst_26 = arith.constant 1.000000e+00 : f32
    %137 = vector.broadcast %cst_26 : f32 to vector<2x128xf32>
    %138 = arith.addf %137, %136 : vector<2x128xf32>
    %139 = arith.divf %137, %138 : vector<2x128xf32>
    %140 = arith.select %5, %134, %139 : vector<2x128xi1>, vector<2x128xf32>
    %141 = vector.extract_strided_slice %140 {offsets = [0, 0], sizes = [2, 32], strides = [1, 1]} : vector<2x128xf32> to vector<2x32xf32>
    %142 = vector.extract_strided_slice %140 {offsets = [0, 32], sizes = [2, 32], strides = [1, 1]} : vector<2x128xf32> to vector<2x32xf32>
    %143 = vector.extract_strided_slice %140 {offsets = [0, 64], sizes = [2, 32], strides = [1, 1]} : vector<2x128xf32> to vector<2x32xf32>
    %144 = vector.extract_strided_slice %140 {offsets = [0, 96], sizes = [2, 32], strides = [1, 1]} : vector<2x128xf32> to vector<2x32xf32>
    %145 = arith.mulf %142, %128 : vector<2x32xf32>
    %146 = arith.mulf %141, %143 : vector<2x32xf32>
    %147 = arith.addf %145, %146 : vector<2x32xf32>
    %148 = math.tanh %147 : vector<2x32xf32>
    %149 = arith.mulf %144, %148 : vector<2x32xf32>
    %150 = vector.extract_strided_slice %12 {offsets = [14, 0], sizes = [2, 128], strides = [1, 1]} : vector<16x128xf32> to vector<2x128xf32>
    %cst_27 = arith.constant dense<0.000000e+00> : vector<2x128xf32>
    %151 = tpu.matmul %149, %7, %cst_27 {dimension_numbers = #tpu.dot_dimension_numbers<[1], [0], [0], [1], [0, 0, 1, 1], [], []>} : vector<2x32xf32>, vector<32x128xf32>, vector<2x128xf32> -> vector<2x128xf32>
    %152 = arith.addf %150, %151 : vector<2x128xf32>
    %153 = math.tanh %152 : vector<2x128xf32>
    %154 = arith.negf %152 : vector<2x128xf32>
    %155 = math.exp %154 : vector<2x128xf32>
    %cst_28 = arith.constant 1.000000e+00 : f32
    %156 = vector.broadcast %cst_28 : f32 to vector<2x128xf32>
    %157 = arith.addf %156, %155 : vector<2x128xf32>
    %158 = arith.divf %156, %157 : vector<2x128xf32>
    %159 = arith.select %5, %153, %158 : vector<2x128xi1>, vector<2x128xf32>
    %160 = vector.extract_strided_slice %159 {offsets = [0, 0], sizes = [2, 32], strides = [1, 1]} : vector<2x128xf32> to vector<2x32xf32>
    %161 = vector.extract_strided_slice %159 {offsets = [0, 32], sizes = [2, 32], strides = [1, 1]} : vector<2x128xf32> to vector<2x32xf32>
    %162 = vector.extract_strided_slice %159 {offsets = [0, 64], sizes = [2, 32], strides = [1, 1]} : vector<2x128xf32> to vector<2x32xf32>
    %163 = vector.extract_strided_slice %159 {offsets = [0, 96], sizes = [2, 32], strides = [1, 1]} : vector<2x128xf32> to vector<2x32xf32>
    %164 = arith.mulf %161, %147 : vector<2x32xf32>
    %165 = arith.mulf %160, %162 : vector<2x32xf32>
    %166 = arith.addf %164, %165 : vector<2x32xf32>
    %167 = math.tanh %166 : vector<2x32xf32>
    %168 = arith.mulf %163, %167 : vector<2x32xf32>
    %c0_29 = arith.constant 0 : index
    %c0_30 = arith.constant 0 : index
    %c0_31 = arith.constant 0 : index
    %169 = vector.load %arg12[%c0_29, %c0_30, %c0_31] : memref<2x2x32xf32, #tpu.memory_space<vmem>>, vector<1x2x32xf32>
    %170 = vector.shape_cast %169 : vector<1x2x32xf32> to vector<2x32xf32>
    %171 = vector.shape_cast %168 : vector<2x32xf32> to vector<1x2x32xf32>
    tpu.vector_store %arg12[%c0_29, %c0_30, %c0_31], %171 {strides = array<i32>} : memref<2x2x32xf32, #tpu.memory_space<vmem>>, vector<1x2x32xf32>,
    %c0_32 = arith.constant 0 : index
    %c0_33 = arith.constant 0 : index
    %c0_34 = arith.constant 0 : index
    %172 = vector.load %arg13[%c0_32, %c0_33, %c0_34] : memref<2x2x32xf32, #tpu.memory_space<vmem>>, vector<1x2x32xf32>
    %173 = vector.shape_cast %172 : vector<1x2x32xf32> to vector<2x32xf32>
    %174 = vector.shape_cast %166 : vector<2x32xf32> to vector<1x2x32xf32>
    tpu.vector_store %arg13[%c0_32, %c0_33, %c0_34], %174 {strides = array<i32>} : memref<2x2x32xf32, #tpu.memory_space<vmem>>, vector<1x2x32xf32>,
    %c0_35 = arith.constant 0 : index
    %c0_36 = arith.constant 0 : index
    %175 = vector.load %arg6[%c0_35, %c0_36] : memref<32x128xf32, #tpu.memory_space<vmem>>, vector<32x128xf32>
    %c0_37 = arith.constant 0 : index
    %c0_38 = arith.constant 0 : index
    %176 = vector.load %arg7[%c0_37, %c0_38] : memref<32x128xf32, #tpu.memory_space<vmem>>, vector<32x128xf32>
    %c0_39 = arith.constant 0 : index
    %c0_40 = arith.constant 0 : index
    %177 = vector.load %arg8[%c0_39, %c0_40] : memref<1x128xf32, #tpu.memory_space<vmem>>, vector<1x128xf32>
    %178 = tpu.concatenate %35, %54, %73, %92, %111, %130, %149, %168 in 0 : vector<2x32xf32>, vector<2x32xf32>, vector<2x32xf32>, vector<2x32xf32>, vector<2x32xf32>, vector<2x32xf32>, vector<2x32xf32>, vector<2x32xf32> -> vector<16x32xf32>
    %cst_41 = arith.constant dense<0.000000e+00> : vector<16x128xf32>
    %179 = tpu.matmul %178, %175, %cst_41 {dimension_numbers = #tpu.dot_dimension_numbers<[1], [0], [0], [1], [0, 0, 1, 1], [], []>} : vector<16x32xf32>, vector<32x128xf32>, vector<16x128xf32> -> vector<16x128xf32>
    %180 = vector.broadcast %177 : vector<1x128xf32> to vector<16x128xf32>
    %181 = arith.addf %179, %180 : vector<16x128xf32>
    %c1 = arith.constant 1 : index
    %c0_42 = arith.constant 0 : index
    %c0_43 = arith.constant 0 : index
    %182 = vector.load %arg1[%c1, %c0_42, %c0_43] : memref<2x2x32xf32, #tpu.memory_space<vmem>>, vector<1x2x32xf32>
    %183 = vector.shape_cast %182 : vector<1x2x32xf32> to vector<2x32xf32>
    %c1_44 = arith.constant 1 : index
    %c0_45 = arith.constant 0 : index
    %c0_46 = arith.constant 0 : index
    %184 = vector.load %arg2[%c1_44, %c0_45, %c0_46] : memref<2x2x32xf32, #tpu.memory_space<vmem>>, vector<1x2x32xf32>
    %185 = vector.shape_cast %184 : vector<1x2x32xf32> to vector<2x32xf32>
    %186 = vector.extract_strided_slice %181 {offsets = [0, 0], sizes = [2, 128], strides = [1, 1]} : vector<16x128xf32> to vector<2x128xf32>
    %cst_47 = arith.constant dense<0.000000e+00> : vector<2x128xf32>
    %187 = tpu.matmul %183, %176, %cst_47 {dimension_numbers = #tpu.dot_dimension_numbers<[1], [0], [0], [1], [0, 0, 1, 1], [], []>} : vector<2x32xf32>, vector<32x128xf32>, vector<2x128xf32> -> vector<2x128xf32>
    %188 = arith.addf %186, %187 : vector<2x128xf32>
    %189 = math.tanh %188 : vector<2x128xf32>
    %190 = arith.negf %188 : vector<2x128xf32>
    %191 = math.exp %190 : vector<2x128xf32>
    %cst_48 = arith.constant 1.000000e+00 : f32
    %192 = vector.broadcast %cst_48 : f32 to vector<2x128xf32>
    %193 = arith.addf %192, %191 : vector<2x128xf32>
    %194 = arith.divf %192, %193 : vector<2x128xf32>
    %195 = arith.select %5, %189, %194 : vector<2x128xi1>, vector<2x128xf32>
    %196 = vector.extract_strided_slice %195 {offsets = [0, 0], sizes = [2, 32], strides = [1, 1]} : vector<2x128xf32> to vector<2x32xf32>
    %197 = vector.extract_strided_slice %195 {offsets = [0, 32], sizes = [2, 32], strides = [1, 1]} : vector<2x128xf32> to vector<2x32xf32>
    %198 = vector.extract_strided_slice %195 {offsets = [0, 64], sizes = [2, 32], strides = [1, 1]} : vector<2x128xf32> to vector<2x32xf32>
    %199 = vector.extract_strided_slice %195 {offsets = [0, 96], sizes = [2, 32], strides = [1, 1]} : vector<2x128xf32> to vector<2x32xf32>
    %200 = arith.mulf %197, %185 : vector<2x32xf32>
    %201 = arith.mulf %196, %198 : vector<2x32xf32>
    %202 = arith.addf %200, %201 : vector<2x32xf32>
    %203 = math.tanh %202 : vector<2x32xf32>
    %204 = arith.mulf %199, %203 : vector<2x32xf32>
    %205 = vector.extract_strided_slice %181 {offsets = [2, 0], sizes = [2, 128], strides = [1, 1]} : vector<16x128xf32> to vector<2x128xf32>
    %cst_49 = arith.constant dense<0.000000e+00> : vector<2x128xf32>
    %206 = tpu.matmul %204, %176, %cst_49 {dimension_numbers = #tpu.dot_dimension_numbers<[1], [0], [0], [1], [0, 0, 1, 1], [], []>} : vector<2x32xf32>, vector<32x128xf32>, vector<2x128xf32> -> vector<2x128xf32>
    %207 = arith.addf %205, %206 : vector<2x128xf32>
    %208 = math.tanh %207 : vector<2x128xf32>
    %209 = arith.negf %207 : vector<2x128xf32>
    %210 = math.exp %209 : vector<2x128xf32>
    %cst_50 = arith.constant 1.000000e+00 : f32
    %211 = vector.broadcast %cst_50 : f32 to vector<2x128xf32>
    %212 = arith.addf %211, %210 : vector<2x128xf32>
    %213 = arith.divf %211, %212 : vector<2x128xf32>
    %214 = arith.select %5, %208, %213 : vector<2x128xi1>, vector<2x128xf32>
    %215 = vector.extract_strided_slice %214 {offsets = [0, 0], sizes = [2, 32], strides = [1, 1]} : vector<2x128xf32> to vector<2x32xf32>
    %216 = vector.extract_strided_slice %214 {offsets = [0, 32], sizes = [2, 32], strides = [1, 1]} : vector<2x128xf32> to vector<2x32xf32>
    %217 = vector.extract_strided_slice %214 {offsets = [0, 64], sizes = [2, 32], strides = [1, 1]} : vector<2x128xf32> to vector<2x32xf32>
    %218 = vector.extract_strided_slice %214 {offsets = [0, 96], sizes = [2, 32], strides = [1, 1]} : vector<2x128xf32> to vector<2x32xf32>
    %219 = arith.mulf %216, %202 : vector<2x32xf32>
    %220 = arith.mulf %215, %217 : vector<2x32xf32>
    %221 = arith.addf %219, %220 : vector<2x32xf32>
    %222 = math.tanh %221 : vector<2x32xf32>
    %223 = arith.mulf %218, %222 : vector<2x32xf32>
    %224 = vector.extract_strided_slice %181 {offsets = [4, 0], sizes = [2, 128], strides = [1, 1]} : vector<16x128xf32> to vector<2x128xf32>
    %cst_51 = arith.constant dense<0.000000e+00> : vector<2x128xf32>
    %225 = tpu.matmul %223, %176, %cst_51 {dimension_numbers = #tpu.dot_dimension_numbers<[1], [0], [0], [1], [0, 0, 1, 1], [], []>} : vector<2x32xf32>, vector<32x128xf32>, vector<2x128xf32> -> vector<2x128xf32>
    %226 = arith.addf %224, %225 : vector<2x128xf32>
    %227 = math.tanh %226 : vector<2x128xf32>
    %228 = arith.negf %226 : vector<2x128xf32>
    %229 = math.exp %228 : vector<2x128xf32>
    %cst_52 = arith.constant 1.000000e+00 : f32
    %230 = vector.broadcast %cst_52 : f32 to vector<2x128xf32>
    %231 = arith.addf %230, %229 : vector<2x128xf32>
    %232 = arith.divf %230, %231 : vector<2x128xf32>
    %233 = arith.select %5, %227, %232 : vector<2x128xi1>, vector<2x128xf32>
    %234 = vector.extract_strided_slice %233 {offsets = [0, 0], sizes = [2, 32], strides = [1, 1]} : vector<2x128xf32> to vector<2x32xf32>
    %235 = vector.extract_strided_slice %233 {offsets = [0, 32], sizes = [2, 32], strides = [1, 1]} : vector<2x128xf32> to vector<2x32xf32>
    %236 = vector.extract_strided_slice %233 {offsets = [0, 64], sizes = [2, 32], strides = [1, 1]} : vector<2x128xf32> to vector<2x32xf32>
    %237 = vector.extract_strided_slice %233 {offsets = [0, 96], sizes = [2, 32], strides = [1, 1]} : vector<2x128xf32> to vector<2x32xf32>
    %238 = arith.mulf %235, %221 : vector<2x32xf32>
    %239 = arith.mulf %234, %236 : vector<2x32xf32>
    %240 = arith.addf %238, %239 : vector<2x32xf32>
    %241 = math.tanh %240 : vector<2x32xf32>
    %242 = arith.mulf %237, %241 : vector<2x32xf32>
    %243 = vector.extract_strided_slice %181 {offsets = [6, 0], sizes = [2, 128], strides = [1, 1]} : vector<16x128xf32> to vector<2x128xf32>
    %cst_53 = arith.constant dense<0.000000e+00> : vector<2x128xf32>
    %244 = tpu.matmul %242, %176, %cst_53 {dimension_numbers = #tpu.dot_dimension_numbers<[1], [0], [0], [1], [0, 0, 1, 1], [], []>} : vector<2x32xf32>, vector<32x128xf32>, vector<2x128xf32> -> vector<2x128xf32>
    %245 = arith.addf %243, %244 : vector<2x128xf32>
    %246 = math.tanh %245 : vector<2x128xf32>
    %247 = arith.negf %245 : vector<2x128xf32>
    %248 = math.exp %247 : vector<2x128xf32>
    %cst_54 = arith.constant 1.000000e+00 : f32
    %249 = vector.broadcast %cst_54 : f32 to vector<2x128xf32>
    %250 = arith.addf %249, %248 : vector<2x128xf32>
    %251 = arith.divf %249, %250 : vector<2x128xf32>
    %252 = arith.select %5, %246, %251 : vector<2x128xi1>, vector<2x128xf32>
    %253 = vector.extract_strided_slice %252 {offsets = [0, 0], sizes = [2, 32], strides = [1, 1]} : vector<2x128xf32> to vector<2x32xf32>
    %254 = vector.extract_strided_slice %252 {offsets = [0, 32], sizes = [2, 32], strides = [1, 1]} : vector<2x128xf32> to vector<2x32xf32>
    %255 = vector.extract_strided_slice %252 {offsets = [0, 64], sizes = [2, 32], strides = [1, 1]} : vector<2x128xf32> to vector<2x32xf32>
    %256 = vector.extract_strided_slice %252 {offsets = [0, 96], sizes = [2, 32], strides = [1, 1]} : vector<2x128xf32> to vector<2x32xf32>
    %257 = arith.mulf %254, %240 : vector<2x32xf32>
    %258 = arith.mulf %253, %255 : vector<2x32xf32>
    %259 = arith.addf %257, %258 : vector<2x32xf32>
    %260 = math.tanh %259 : vector<2x32xf32>
    %261 = arith.mulf %256, %260 : vector<2x32xf32>
    %262 = vector.extract_strided_slice %181 {offsets = [8, 0], sizes = [2, 128], strides = [1, 1]} : vector<16x128xf32> to vector<2x128xf32>
    %cst_55 = arith.constant dense<0.000000e+00> : vector<2x128xf32>
    %263 = tpu.matmul %261, %176, %cst_55 {dimension_numbers = #tpu.dot_dimension_numbers<[1], [0], [0], [1], [0, 0, 1, 1], [], []>} : vector<2x32xf32>, vector<32x128xf32>, vector<2x128xf32> -> vector<2x128xf32>
    %264 = arith.addf %262, %263 : vector<2x128xf32>
    %265 = math.tanh %264 : vector<2x128xf32>
    %266 = arith.negf %264 : vector<2x128xf32>
    %267 = math.exp %266 : vector<2x128xf32>
    %cst_56 = arith.constant 1.000000e+00 : f32
    %268 = vector.broadcast %cst_56 : f32 to vector<2x128xf32>
    %269 = arith.addf %268, %267 : vector<2x128xf32>
    %270 = arith.divf %268, %269 : vector<2x128xf32>
    %271 = arith.select %5, %265, %270 : vector<2x128xi1>, vector<2x128xf32>
    %272 = vector.extract_strided_slice %271 {offsets = [0, 0], sizes = [2, 32], strides = [1, 1]} : vector<2x128xf32> to vector<2x32xf32>
    %273 = vector.extract_strided_slice %271 {offsets = [0, 32], sizes = [2, 32], strides = [1, 1]} : vector<2x128xf32> to vector<2x32xf32>
    %274 = vector.extract_strided_slice %271 {offsets = [0, 64], sizes = [2, 32], strides = [1, 1]} : vector<2x128xf32> to vector<2x32xf32>
    %275 = vector.extract_strided_slice %271 {offsets = [0, 96], sizes = [2, 32], strides = [1, 1]} : vector<2x128xf32> to vector<2x32xf32>
    %276 = arith.mulf %273, %259 : vector<2x32xf32>
    %277 = arith.mulf %272, %274 : vector<2x32xf32>
    %278 = arith.addf %276, %277 : vector<2x32xf32>
    %279 = math.tanh %278 : vector<2x32xf32>
    %280 = arith.mulf %275, %279 : vector<2x32xf32>
    %281 = vector.extract_strided_slice %181 {offsets = [10, 0], sizes = [2, 128], strides = [1, 1]} : vector<16x128xf32> to vector<2x128xf32>
    %cst_57 = arith.constant dense<0.000000e+00> : vector<2x128xf32>
    %282 = tpu.matmul %280, %176, %cst_57 {dimension_numbers = #tpu.dot_dimension_numbers<[1], [0], [0], [1], [0, 0, 1, 1], [], []>} : vector<2x32xf32>, vector<32x128xf32>, vector<2x128xf32> -> vector<2x128xf32>
    %283 = arith.addf %281, %282 : vector<2x128xf32>
    %284 = math.tanh %283 : vector<2x128xf32>
    %285 = arith.negf %283 : vector<2x128xf32>
    %286 = math.exp %285 : vector<2x128xf32>
    %cst_58 = arith.constant 1.000000e+00 : f32
    %287 = vector.broadcast %cst_58 : f32 to vector<2x128xf32>
    %288 = arith.addf %287, %286 : vector<2x128xf32>
    %289 = arith.divf %287, %288 : vector<2x128xf32>
    %290 = arith.select %5, %284, %289 : vector<2x128xi1>, vector<2x128xf32>
    %291 = vector.extract_strided_slice %290 {offsets = [0, 0], sizes = [2, 32], strides = [1, 1]} : vector<2x128xf32> to vector<2x32xf32>
    %292 = vector.extract_strided_slice %290 {offsets = [0, 32], sizes = [2, 32], strides = [1, 1]} : vector<2x128xf32> to vector<2x32xf32>
    %293 = vector.extract_strided_slice %290 {offsets = [0, 64], sizes = [2, 32], strides = [1, 1]} : vector<2x128xf32> to vector<2x32xf32>
    %294 = vector.extract_strided_slice %290 {offsets = [0, 96], sizes = [2, 32], strides = [1, 1]} : vector<2x128xf32> to vector<2x32xf32>
    %295 = arith.mulf %292, %278 : vector<2x32xf32>
    %296 = arith.mulf %291, %293 : vector<2x32xf32>
    %297 = arith.addf %295, %296 : vector<2x32xf32>
    %298 = math.tanh %297 : vector<2x32xf32>
    %299 = arith.mulf %294, %298 : vector<2x32xf32>
    %300 = vector.extract_strided_slice %181 {offsets = [12, 0], sizes = [2, 128], strides = [1, 1]} : vector<16x128xf32> to vector<2x128xf32>
    %cst_59 = arith.constant dense<0.000000e+00> : vector<2x128xf32>
    %301 = tpu.matmul %299, %176, %cst_59 {dimension_numbers = #tpu.dot_dimension_numbers<[1], [0], [0], [1], [0, 0, 1, 1], [], []>} : vector<2x32xf32>, vector<32x128xf32>, vector<2x128xf32> -> vector<2x128xf32>
    %302 = arith.addf %300, %301 : vector<2x128xf32>
    %303 = math.tanh %302 : vector<2x128xf32>
    %304 = arith.negf %302 : vector<2x128xf32>
    %305 = math.exp %304 : vector<2x128xf32>
    %cst_60 = arith.constant 1.000000e+00 : f32
    %306 = vector.broadcast %cst_60 : f32 to vector<2x128xf32>
    %307 = arith.addf %306, %305 : vector<2x128xf32>
    %308 = arith.divf %306, %307 : vector<2x128xf32>
    %309 = arith.select %5, %303, %308 : vector<2x128xi1>, vector<2x128xf32>
    %310 = vector.extract_strided_slice %309 {offsets = [0, 0], sizes = [2, 32], strides = [1, 1]} : vector<2x128xf32> to vector<2x32xf32>
    %311 = vector.extract_strided_slice %309 {offsets = [0, 32], sizes = [2, 32], strides = [1, 1]} : vector<2x128xf32> to vector<2x32xf32>
    %312 = vector.extract_strided_slice %309 {offsets = [0, 64], sizes = [2, 32], strides = [1, 1]} : vector<2x128xf32> to vector<2x32xf32>
    %313 = vector.extract_strided_slice %309 {offsets = [0, 96], sizes = [2, 32], strides = [1, 1]} : vector<2x128xf32> to vector<2x32xf32>
    %314 = arith.mulf %311, %297 : vector<2x32xf32>
    %315 = arith.mulf %310, %312 : vector<2x32xf32>
    %316 = arith.addf %314, %315 : vector<2x32xf32>
    %317 = math.tanh %316 : vector<2x32xf32>
    %318 = arith.mulf %313, %317 : vector<2x32xf32>
    %319 = vector.extract_strided_slice %181 {offsets = [14, 0], sizes = [2, 128], strides = [1, 1]} : vector<16x128xf32> to vector<2x128xf32>
    %cst_61 = arith.constant dense<0.000000e+00> : vector<2x128xf32>
    %320 = tpu.matmul %318, %176, %cst_61 {dimension_numbers = #tpu.dot_dimension_numbers<[1], [0], [0], [1], [0, 0, 1, 1], [], []>} : vector<2x32xf32>, vector<32x128xf32>, vector<2x128xf32> -> vector<2x128xf32>
    %321 = arith.addf %319, %320 : vector<2x128xf32>
    %322 = math.tanh %321 : vector<2x128xf32>
    %323 = arith.negf %321 : vector<2x128xf32>
    %324 = math.exp %323 : vector<2x128xf32>
    %cst_62 = arith.constant 1.000000e+00 : f32
    %325 = vector.broadcast %cst_62 : f32 to vector<2x128xf32>
    %326 = arith.addf %325, %324 : vector<2x128xf32>
    %327 = arith.divf %325, %326 : vector<2x128xf32>
    %328 = arith.select %5, %322, %327 : vector<2x128xi1>, vector<2x128xf32>
    %329 = vector.extract_strided_slice %328 {offsets = [0, 0], sizes = [2, 32], strides = [1, 1]} : vector<2x128xf32> to vector<2x32xf32>
    %330 = vector.extract_strided_slice %328 {offsets = [0, 32], sizes = [2, 32], strides = [1, 1]} : vector<2x128xf32> to vector<2x32xf32>
    %331 = vector.extract_strided_slice %328 {offsets = [0, 64], sizes = [2, 32], strides = [1, 1]} : vector<2x128xf32> to vector<2x32xf32>
    %332 = vector.extract_strided_slice %328 {offsets = [0, 96], sizes = [2, 32], strides = [1, 1]} : vector<2x128xf32> to vector<2x32xf32>
    %333 = arith.mulf %330, %316 : vector<2x32xf32>
    %334 = arith.mulf %329, %331 : vector<2x32xf32>
    %335 = arith.addf %333, %334 : vector<2x32xf32>
    %336 = math.tanh %335 : vector<2x32xf32>
    %337 = arith.mulf %332, %336 : vector<2x32xf32>
    %c1_63 = arith.constant 1 : index
    %c0_64 = arith.constant 0 : index
    %c0_65 = arith.constant 0 : index
    %338 = vector.load %arg12[%c1_63, %c0_64, %c0_65] : memref<2x2x32xf32, #tpu.memory_space<vmem>>, vector<1x2x32xf32>
    %339 = vector.shape_cast %338 : vector<1x2x32xf32> to vector<2x32xf32>
    %340 = vector.shape_cast %337 : vector<2x32xf32> to vector<1x2x32xf32>
    tpu.vector_store %arg12[%c1_63, %c0_64, %c0_65], %340 {strides = array<i32>} : memref<2x2x32xf32, #tpu.memory_space<vmem>>, vector<1x2x32xf32>,
    %c1_66 = arith.constant 1 : index
    %c0_67 = arith.constant 0 : index
    %c0_68 = arith.constant 0 : index
    %341 = vector.load %arg13[%c1_66, %c0_67, %c0_68] : memref<2x2x32xf32, #tpu.memory_space<vmem>>, vector<1x2x32xf32>
    %342 = vector.shape_cast %341 : vector<1x2x32xf32> to vector<2x32xf32>
    %343 = vector.shape_cast %335 : vector<2x32xf32> to vector<1x2x32xf32>
    tpu.vector_store %arg13[%c1_66, %c0_67, %c0_68], %343 {strides = array<i32>} : memref<2x2x32xf32, #tpu.memory_space<vmem>>, vector<1x2x32xf32>,
    %344 = vector.shape_cast %204 : vector<2x32xf32> to vector<2x1x32xf32>
    %345 = vector.shape_cast %223 : vector<2x32xf32> to vector<2x1x32xf32>
    %346 = vector.shape_cast %242 : vector<2x32xf32> to vector<2x1x32xf32>
    %347 = vector.shape_cast %261 : vector<2x32xf32> to vector<2x1x32xf32>
    %348 = vector.shape_cast %280 : vector<2x32xf32> to vector<2x1x32xf32>
    %349 = vector.shape_cast %299 : vector<2x32xf32> to vector<2x1x32xf32>
    %350 = vector.shape_cast %318 : vector<2x32xf32> to vector<2x1x32xf32>
    %351 = vector.shape_cast %337 : vector<2x32xf32> to vector<2x1x32xf32>
    %352 = tpu.concatenate %344, %345, %346, %347, %348, %349, %350, %351 in 1 : vector<2x1x32xf32>, vector<2x1x32xf32>, vector<2x1x32xf32>, vector<2x1x32xf32>, vector<2x1x32xf32>, vector<2x1x32xf32>, vector<2x1x32xf32>, vector<2x1x32xf32> -> vector<2x8x32xf32>
    %353 = vector.shape_cast %352 : vector<2x8x32xf32> to vector<16x32xf32>
    %c0_69 = arith.constant 0 : index
    %c0_70 = arith.constant 0 : index
    %354 = vector.load %arg9[%c0_69, %c0_70] : memref<32x16xf32, #tpu.memory_space<vmem>>, vector<32x16xf32>
    %cst_71 = arith.constant dense<0.000000e+00> : vector<16x16xf32>
    %355 = tpu.matmul %353, %354, %cst_71 {dimension_numbers = #tpu.dot_dimension_numbers<[1], [0], [0], [1], [0, 0, 1, 1], [], []>} : vector<16x32xf32>, vector<32x16xf32>, vector<16x16xf32> -> vector<16x16xf32>
    %c0_72 = arith.constant 0 : index
    %c0_73 = arith.constant 0 : index
    %356 = vector.load %arg10[%c0_72, %c0_73] : memref<1x16xf32, #tpu.memory_space<vmem>>, vector<1x16xf32>
    %357 = vector.broadcast %356 : vector<1x16xf32> to vector<16x16xf32>
    %358 = arith.addf %355, %357 : vector<16x16xf32>
    %c0_74 = arith.constant 0 : index
    %c0_75 = arith.constant 0 : index
    %359 = vector.load %arg11[%c0_74, %c0_75] : memref<16x16xf32, #tpu.memory_space<vmem>>, vector<16x16xf32>
    tpu.vector_store %arg11[%c0_74, %c0_75], %358 {strides = array<i32>} : memref<16x16xf32, #tpu.memory_space<vmem>>, vector<16x16xf32>,
    return
  }
}

</mosaic_0001>

<llo_original>
// kernel: rnn_forward.1
$region0: #{rnn_forward.1}
  #allocation0 [shape = 'u32[]', space=smem, size = 0x4, offset = 0x4, fixed_abs, tag = 'smem constant byte address 0x4 - core index']
  #allocation1 [shape = 'u32[72,128]{1,0:T(1,128)}', space=vmem, size = 0x9000, scoped, tag = 'internal scratch']
  %s0 = inlined_call_operand.vmem [shape: f32[16,16], index: 0, kind: input, shape index: {}]
  %s1 = inlined_call_operand.hbm [shape: f32[2,2,32], index: 1, kind: input, shape index: {}]
  %s2 = inlined_call_operand.hbm [shape: f32[2,2,32], index: 2, kind: input, shape index: {}]
  %s3 = inlined_call_operand.hbm [shape: f32[16,128], index: 3, kind: input, shape index: {}]
  %s4 = inlined_call_operand.vmem [shape: f32[32,128], index: 4, kind: input, shape index: {}]
  %s5 = inlined_call_operand.vmem [shape: f32[1,128], index: 5, kind: input, shape index: {}]
  %s6 = inlined_call_operand.vmem [shape: f32[32,128], index: 6, kind: input, shape index: {}]
  %s7 = inlined_call_operand.hbm [shape: f32[32,128], index: 7, kind: input, shape index: {}]
  %s8 = inlined_call_operand.vmem [shape: f32[1,128], index: 8, kind: input, shape index: {}]
  %s9 = inlined_call_operand.vmem [shape: f32[32,16], index: 9, kind: input, shape index: {}]
  %s10 = inlined_call_operand.vmem [shape: f32[1,16], index: 10, kind: input, shape index: {}]
  %s11 = inlined_call_operand.hbm [shape: f32[16,16], index: 11, kind: output, shape index: {0}]
  %s12 = inlined_call_operand.hbm [shape: f32[2,2,32], index: 12, kind: output, shape index: {1}]
  %s13 = inlined_call_operand.hbm [shape: f32[2,2,32], index: 13, kind: output, shape index: {2}]
  %14 = xla_tuple %s11, %s12, %s13
  %s15 = sld [smem:[#allocation0]]
  $region86: #{rnn_forward.1} parent=0
    _
  %s17 = ssub.s32 1, %s15
  %s18 = scalar_select 0, %s17, %s15
  $region1: #{rnn_forward.1} parent=0
    #allocation2 [shape = 'u8[2048]{0}', space=vmem, size = 0x800, scoped, tag = 'input window, operand 1, single buffered']
    #allocation3 [shape = 's32[1]{0}', space=sflag, size = 0x4, scoped, tag = 'scoped memory for rnn_forward.1']
    #allocation4 [shape = 's32[1]{0}', space=sflag, size = 0x4, scoped, tag = 'scoped memory for rnn_forward.1']
    #allocation5 [shape = 'u8[2048]{0}', space=vmem, size = 0x800, scoped, tag = 'input window, operand 2, single buffered']
    #allocation6 [shape = 's32[1]{0}', space=sflag, size = 0x4, scoped, tag = 'scoped memory for rnn_forward.1']
    #allocation7 [shape = 'u8[8192]{0}', space=vmem, size = 0x2000, scoped, tag = 'input window, operand 3, single buffered']
    #allocation8 [shape = 'u8[16384]{0}', space=vmem, size = 0x4000, scoped, tag = 'input window, operand 7, single buffered']
    #allocation9 [shape = 's32[1]{0}', space=sflag, size = 0x4, scoped, tag = 'scoped memory for rnn_forward.1']
    #allocation10 [shape = 'u8[8192]{0}', space=vmem, size = 0x2000, scoped, tag = 'output window, operand 0, single buffered']
    #allocation11 [shape = 'u8[2048]{0}', space=vmem, size = 0x800, scoped, tag = 'output window, operand 1, single buffered']
    #allocation12 [shape = 's32[1]{0}', space=sflag, size = 0x4, scoped, tag = 'scoped memory for rnn_forward.1']
    #allocation13 [shape = 'u8[2048]{0}', space=vmem, size = 0x800, scoped, tag = 'output window, operand 2, single buffered']
    %19 = vsyncpa [#allocation3], 0
    %20 = vsyncpa [#allocation6], 0
    %21 = vsyncpa [#allocation9], 0
    %22 = vsyncpa [#allocation4], 0
    %23 = vsyncpa [#allocation12], 0
    // Predicated region
    $region2: #{rnn_forward.1} parent=1 // pred_check
      _
    $region3: #{rnn_forward.1} parent=1 // pred_check_branch
      %25 = sbr.rel (0) target = $region5
    $region4: #{rnn_forward.1} parent=1 // pred_region
      _
    $region5: #{rnn_forward.1} parent=1 // pred_fallthru
      _
    // Predicated region
    $region6: #{rnn_forward.1} parent=1 // pred_check
      _
    $region7: #{rnn_forward.1} parent=1 // pred_check_branch
      %27 = sbr.rel (0) target = $region9
    $region8: #{rnn_forward.1} parent=1 // pred_region
      %29 = vsyncadd [#allocation3], 0
      %s30 = sshll.u32 %s1, 4
      %s31 = int_to_ptr.hbm [resolvable:$true] %s30
      %s32 = sshll.u32 [#allocation2], 4
      %s33 = int_to_ptr.vmem [resolvable:$true] %s32
      %38 = dma.hbm_to_vmem [thread:$0]  %s31, 64, %s33, [#allocation3], 32, 32, 2
    $region9: #{rnn_forward.1} parent=1 // pred_fallthru
      _
    // Predicated region
    $region10: #{rnn_forward.1} parent=1 // pred_check
      _
    $region11: #{rnn_forward.1} parent=1 // pred_check_branch
      %40 = sbr.rel (0) target = $region13
    $region12: #{rnn_forward.1} parent=1 // pred_region
      %42 = vsyncadd [#allocation6], 0
      %s43 = sshll.u32 %s2, 4
      %s44 = int_to_ptr.hbm [resolvable:$true] %s43
      %s45 = sshll.u32 [#allocation5], 4
      %s46 = int_to_ptr.vmem [resolvable:$true] %s45
      %51 = dma.hbm_to_vmem [thread:$0]  %s44, 64, %s46, [#allocation6], 32, 32, 2
    $region13: #{rnn_forward.1} parent=1 // pred_fallthru
      _
    // Predicated region
    $region14: #{rnn_forward.1} parent=1 // pred_check
      _
    $region15: #{rnn_forward.1} parent=1 // pred_check_branch
      %53 = sbr.rel (0) target = $region17
    $region16: #{rnn_forward.1} parent=1 // pred_region
      %55 = vsyncadd [#allocation6], 0
      %s56 = sshll.u32 %s3, 4
      %s57 = int_to_ptr.hbm [resolvable:$true] %s56
      %s58 = sshll.u32 [#allocation7], 4
      %s59 = int_to_ptr.vmem [resolvable:$true] %s58
      %64 = dma.hbm_to_vmem [thread:$0]  %s57, 256, %s59, [#allocation6], 128, 128, 8
    $region17: #{rnn_forward.1} parent=1 // pred_fallthru
      _
    // Predicated region
    $region18: #{rnn_forward.1} parent=1 // pred_check
      _
    $region19: #{rnn_forward.1} parent=1 // pred_check_branch
      %66 = sbr.rel (0) target = $region21
    $region20: #{rnn_forward.1} parent=1 // pred_region
      _
    $region21: #{rnn_forward.1} parent=1 // pred_fallthru
      _
    // Predicated region
    $region22: #{rnn_forward.1} parent=1 // pred_check
      _
    $region23: #{rnn_forward.1} parent=1 // pred_check_branch
      %68 = sbr.rel (0) target = $region25
    $region24: #{rnn_forward.1} parent=1 // pred_region
      _
    $region25: #{rnn_forward.1} parent=1 // pred_fallthru
      _
    // Predicated region
    $region26: #{rnn_forward.1} parent=1 // pred_check
      _
    $region27: #{rnn_forward.1} parent=1 // pred_check_branch
      %70 = sbr.rel (0) target = $region29
    $region28: #{rnn_forward.1} parent=1 // pred_region
      _
    $region29: #{rnn_forward.1} parent=1 // pred_fallthru
      _
    // Predicated region
    $region30: #{rnn_forward.1} parent=1 // pred_check
      _
    $region31: #{rnn_forward.1} parent=1 // pred_check_branch
      %72 = sbr.rel (0) target = $region33
    $region32: #{rnn_forward.1} parent=1 // pred_region
      %74 = vsyncadd [#allocation9], 0
      %s75 = sshll.u32 %s7, 4
      %s76 = int_to_ptr.hbm [resolvable:$true] %s75
      %s77 = sshll.u32 [#allocation8], 4
      %s78 = int_to_ptr.vmem [resolvable:$true] %s77
      %83 = dma.hbm_to_vmem [thread:$0]  %s76, 512, %s78, [#allocation9], 128, 128, 8
    $region33: #{rnn_forward.1} parent=1 // pred_fallthru
      _
    // Predicated region
    $region34: #{rnn_forward.1} parent=1 // pred_check
      _
    $region35: #{rnn_forward.1} parent=1 // pred_check_branch
      %85 = sbr.rel (0) target = $region37
    $region36: #{rnn_forward.1} parent=1 // pred_region
      _
    $region37: #{rnn_forward.1} parent=1 // pred_fallthru
      _
    // Predicated region
    $region38: #{rnn_forward.1} parent=1 // pred_check
      _
    $region39: #{rnn_forward.1} parent=1 // pred_check_branch
      %87 = sbr.rel (0) target = $region41
    $region40: #{rnn_forward.1} parent=1 // pred_region
      _
    $region41: #{rnn_forward.1} parent=1 // pred_fallthru
      _
    // Predicated region
    $region42: #{rnn_forward.1} parent=1 // pred_check
      _
    $region43: #{rnn_forward.1} parent=1 // pred_check_branch
      %89 = sbr.rel (0) target = $region45
    $region44: #{rnn_forward.1} parent=1 // pred_region
      _
    $region45: #{rnn_forward.1} parent=1 // pred_fallthru
      _
    // Predicated region
    $region46: #{rnn_forward.1} parent=1 // pred_check
      _
    $region47: #{rnn_forward.1} parent=1 // pred_check_branch
      %91 = sbr.rel (0) target = $region49
    $region48: #{rnn_forward.1} parent=1 // pred_region
      %93 = dma.done [#allocation3], 64
    $region49: #{rnn_forward.1} parent=1 // pred_fallthru
      _
    // Predicated region
    $region50: #{rnn_forward.1} parent=1 // pred_check
      _
    $region51: #{rnn_forward.1} parent=1 // pred_check_branch
      %95 = sbr.rel (0) target = $region53
    $region52: #{rnn_forward.1} parent=1 // pred_region
      %97 = dma.done [#allocation6], 64
    $region53: #{rnn_forward.1} parent=1 // pred_fallthru
      _
    // Predicated region
    $region54: #{rnn_forward.1} parent=1 // pred_check
      _
    $region55: #{rnn_forward.1} parent=1 // pred_check_branch
      %99 = sbr.rel (0) target = $region57
    $region56: #{rnn_forward.1} parent=1 // pred_region
      %101 = dma.done [#allocation6], 256
    $region57: #{rnn_forward.1} parent=1 // pred_fallthru
      _
    // Predicated region
    $region58: #{rnn_forward.1} parent=1 // pred_check
      _
    $region59: #{rnn_forward.1} parent=1 // pred_check_branch
      %103 = sbr.rel (0) target = $region61
    $region60: #{rnn_forward.1} parent=1 // pred_region
      %105 = dma.done [#allocation9], 512
    $region61: #{rnn_forward.1} parent=1 // pred_fallthru
      _
    %v106 = vlaneseq
    %v107 = vand.u32 %v106, 127
    %vm108 = vcmp.ge.s32.totalorder %v107, 64
    %vm109 = vcmp.lt.s32.totalorder %v107, 96
    %vm110 = vmand %vm108, %vm109
    %v111 = vld [vmem:[#allocation7] sm:$0xff]
    %v112 = vld [vmem:[#allocation7 + $0x8] sm:$0xff]
    %v113 = vld [vmem:[%s4] sm:$0xff]
    %v114 = vld [vmem:[%s4 + $0x8] sm:$0xff]
    %v115 = vld [vmem:[%s4 + $0x10] sm:$0xff]
    %v116 = vld [vmem:[%s4 + $0x18] sm:$0xff]
    %v117 = vld [vmem:[%s5] sm:$0x1]
    %v118 = vld [vmem:[%s0] sm:$0xff]
    %v119 = vld [vmem:[%s0 + $0x8] sm:$0xff]
    %v121 = vperm.slane %v117, 0
    %vm123 = vcmask 130048
    %v125 = vsel %vm123, %v118, 0
    %v128 = vsel %vm123, %v119, 0
    %130 = vmatpush.msra.mxu0 0.0
    %131 = vmatpush.msra.mxu0 0.0
    %132 = vmatpush.msra.mxu0 0.0
    %133 = vmatpush.msra.mxu0 0.0
    %134 = vmatpush.msra.mxu0 0.0
    %135 = vmatpush.msra.mxu0 0.0
    %136 = vmatpush.msra.mxu0 0.0
    %137 = vmatpush.msra.mxu0 0.0
    %138 = vmatpush.msra.mxu0 0.0
    %139 = vmatpush.msra.mxu0 0.0
    %140 = vmatpush.msra.mxu0 0.0
    %141 = vmatpush.msra.mxu0 0.0
    %142 = vmatpush.msra.mxu0 0.0
    %143 = vmatpush.msra.mxu0 0.0
    %144 = vmatpush.msra.mxu0 %v112
    %145 = vmatpush.msra.mxu0 %v111
    %146 = vmatmul.f32.gmra.mxu0 %v125
    %v147 = vpop.f32.mrf.mxu0
    %v148 = vadd.f32 %v121, %v147
    %149 = vmatmul.f32.gmra.mxu0 %v128
    %v150 = vpop.f32.mrf.mxu0
    %v151 = vadd.f32 %v121, %v150
    %152 = vdwg.mxu0
    %v153 = vld [vmem:[#allocation2] sm:$0x3]
    %v154 = vld [vmem:[#allocation5] sm:$0x3]
    %vm155 = vcmask 261120
    %v157 = vsel %vm155, %v153, 0
    %159 = vmatpush.msra.mxu0 0.0
    %160 = vmatpush.msra.mxu0 0.0
    %161 = vmatpush.msra.mxu0 0.0
    %162 = vmatpush.msra.mxu0 0.0
    %163 = vmatpush.msra.mxu0 0.0
    %164 = vmatpush.msra.mxu0 0.0
    %165 = vmatpush.msra.mxu0 0.0
    %166 = vmatpush.msra.mxu0 0.0
    %167 = vmatpush.msra.mxu0 0.0
    %168 = vmatpush.msra.mxu0 0.0
    %169 = vmatpush.msra.mxu0 0.0
    %170 = vmatpush.msra.mxu0 0.0
    %171 = vmatpush.msra.mxu0 %v116
    %172 = vmatpush.msra.mxu0 %v115
    %173 = vmatpush.msra.mxu0 %v114
    %174 = vmatpush.msra.mxu0 %v113
    %175 = vmatmul.f32.gmra.mxu0 %v157
    %v176 = vpop.f32.mrf.mxu0
    %v177 = vadd.f32 0.0, %v176
    %178 = vdwg.mxu0
    %v179 = vadd.f32 %v148, %v177
    %v180 = vtanh.pop %v179
    %v181 = vxor.u32 %v179, 2147483648
    %v182 = vmul.f32 %v181, 1.442695
    %v183 = vpow.pop %v182
    %v184 = vadd.f32 %v183, 1.0
    %v185 = vrcp.pop %v184
    %v186 = vmul.f32 %v184, %v185
    %v187 = vsub.f32 1.0, %v186
    %v188 = vmul.f32 %v185, %v187
    %v189 = vadd.f32 %v185, %v188
    %vm190 = vweird.f32 %v184
    %vm191 = vweird.f32 %v185
    %vm192 = vmor %vm190, %vm191
    %v193 = vsel %vm192, %v185, %v189
    %v194 = vand.u32 2147483647, %v184
    %vm195 = vcmp.eq.f32.partialorder %v194, 8.507059e+37
    %v196 = vand.u32 %v184, 2147483648
    %v197 = vor.u32 1.1754944e-38, %v196
    %v198 = vsel %vm195, %v197, %v193
    %v199 = vmul.f32 1.0, %v198
    %v200 = vsel %vm110, %v180, %v199
    %202 = vrot.lane.b32.xlu0 %v154, 32
    %v203 = vpop.permute.xlu0 %202
    %v205 = vmul.f32 %v200, %v203
    %207 = vrot.lane.b32.xlu0 %v200, 64
    %v208 = vpop.permute.xlu0 %207
    %v210 = vmul.f32 %v200, %v208
    %212 = vrot.lane.b32.xlu0 %v210, 32
    %v213 = vpop.permute.xlu0 %212
    %v215 = vadd.f32 %v205, %v213
    %v216 = vtanh.pop %v215
    %218 = vrot.lane.b32.xlu0 %v216, 64
    %v219 = vpop.permute.xlu0 %218
    %v221 = vmul.f32 %v200, %v219
    %223 = vrot.lane.b32.xlu0 %v221, 32
    %v224 = vpop.permute.xlu0 %223
    %v225 = vsel %vm155, %v224, 0
    %227 = vmatpush.msra.mxu0 0.0
    %228 = vmatpush.msra.mxu0 0.0
    %229 = vmatpush.msra.mxu0 0.0
    %230 = vmatpush.msra.mxu0 0.0
    %231 = vmatpush.msra.mxu0 0.0
    %232 = vmatpush.msra.mxu0 0.0
    %233 = vmatpush.msra.mxu0 0.0
    %234 = vmatpush.msra.mxu0 0.0
    %235 = vmatpush.msra.mxu0 0.0
    %236 = vmatpush.msra.mxu0 0.0
    %237 = vmatpush.msra.mxu0 0.0
    %238 = vmatpush.msra.mxu0 0.0
    %239 = vmatpush.msra.mxu0 %v116
    %240 = vmatpush.msra.mxu0 %v115
    %241 = vmatpush.msra.mxu0 %v114
    %242 = vmatpush.msra.mxu0 %v113
    %243 = vmatmul.f32.gmra.mxu0 %v225
    %v244 = vpop.f32.mrf.mxu0
    %v245 = vadd.f32 0.0, %v244
    %246 = vdwg.mxu0
    %v248 = vrot.slane %v245, 6
    %v250 = vadd.f32 %v148, %v248
    %v251 = vtanh.pop %v250
    %v252 = vxor.u32 %v250, 2147483648
    %v253 = vmul.f32 %v252, 1.442695
    %v254 = vpow.pop %v253
    %v255 = vadd.f32 %v254, 1.0
    %v256 = vrcp.pop %v255
    %v257 = vmul.f32 %v255, %v256
    %v258 = vsub.f32 1.0, %v257
    %v259 = vmul.f32 %v256, %v258
    %v260 = vadd.f32 %v256, %v259
    %vm261 = vweird.f32 %v255
    %vm262 = vweird.f32 %v256
    %vm263 = vmor %vm261, %vm262
    %v264 = vsel %vm263, %v256, %v260
    %v265 = vand.u32 2147483647, %v255
    %vm266 = vcmp.eq.f32.partialorder %v265, 8.507059e+37
    %v267 = vand.u32 %v255, 2147483648
    %v268 = vor.u32 1.1754944e-38, %v267
    %v269 = vsel %vm266, %v268, %v264
    %v270 = vmul.f32 1.0, %v269
    %v271 = vsel %vm110, %v251, %v270
    %v273 = vrot.slane %v215, 6
    %v275 = vmul.f32 %v271, %v273
    %277 = vrot.lane.b32.xlu0 %v271, 64
    %v278 = vpop.permute.xlu0 %277
    %v280 = vmul.f32 %v271, %v278
    %282 = vrot.lane.b32.xlu0 %v280, 32
    %v283 = vpop.permute.xlu0 %282
    %v285 = vadd.f32 %v275, %v283
    %v286 = vtanh.pop %v285
    %288 = vrot.lane.b32.xlu0 %v286, 64
    %v289 = vpop.permute.xlu0 %288
    %v291 = vmul.f32 %v271, %v289
    %v293 = vrot.slane %v291, 2
    %294 = vrot.lane.b32.xlu0 %v293, 32
    %v295 = vpop.permute.xlu0 %294
    %v296 = vsel %vm155, %v295, 0
    %298 = vmatpush.msra.mxu0 0.0
    %299 = vmatpush.msra.mxu0 0.0
    %300 = vmatpush.msra.mxu0 0.0
    %301 = vmatpush.msra.mxu0 0.0
    %302 = vmatpush.msra.mxu0 0.0
    %303 = vmatpush.msra.mxu0 0.0
    %304 = vmatpush.msra.mxu0 0.0
    %305 = vmatpush.msra.mxu0 0.0
    %306 = vmatpush.msra.mxu0 0.0
    %307 = vmatpush.msra.mxu0 0.0
    %308 = vmatpush.msra.mxu0 0.0
    %309 = vmatpush.msra.mxu0 0.0
    %310 = vmatpush.msra.mxu0 %v116
    %311 = vmatpush.msra.mxu0 %v115
    %312 = vmatpush.msra.mxu0 %v114
    %313 = vmatpush.msra.mxu0 %v113
    %314 = vmatmul.f32.gmra.mxu0 %v296
    %v315 = vpop.f32.mrf.mxu0
    %v316 = vadd.f32 0.0, %v315
    %317 = vdwg.mxu0
    %v319 = vrot.slane %v316, 4
    %v321 = vadd.f32 %v148, %v319
    %v322 = vtanh.pop %v321
    %v323 = vxor.u32 %v321, 2147483648
    %v324 = vmul.f32 %v323, 1.442695
    %v325 = vpow.pop %v324
    %v326 = vadd.f32 %v325, 1.0
    %v327 = vrcp.pop %v326
    %v328 = vmul.f32 %v326, %v327
    %v329 = vsub.f32 1.0, %v328
    %v330 = vmul.f32 %v327, %v329
    %v331 = vadd.f32 %v327, %v330
    %vm332 = vweird.f32 %v326
    %vm333 = vweird.f32 %v327
    %vm334 = vmor %vm332, %vm333
    %v335 = vsel %vm334, %v327, %v331
    %v336 = vand.u32 2147483647, %v326
    %vm337 = vcmp.eq.f32.partialorder %v336, 8.507059e+37
    %v338 = vand.u32 %v326, 2147483648
    %v339 = vor.u32 1.1754944e-38, %v338
    %v340 = vsel %vm337, %v339, %v335
    %v341 = vmul.f32 1.0, %v340
    %v342 = vsel %vm110, %v322, %v341
    %v344 = vrot.slane %v285, 6
    %v346 = vmul.f32 %v342, %v344
    %348 = vrot.lane.b32.xlu0 %v342, 64
    %v349 = vpop.permute.xlu0 %348
    %v351 = vmul.f32 %v342, %v349
    %353 = vrot.lane.b32.xlu0 %v351, 32
    %v354 = vpop.permute.xlu0 %353
    %v356 = vadd.f32 %v346, %v354
    %v357 = vtanh.pop %v356
    %359 = vrot.lane.b32.xlu0 %v357, 64
    %v360 = vpop.permute.xlu0 %359
    %v362 = vmul.f32 %v342, %v360
    %v364 = vrot.slane %v362, 4
    %365 = vrot.lane.b32.xlu0 %v364, 32
    %v366 = vpop.permute.xlu0 %365
    %v367 = vsel %vm155, %v366, 0
    %369 = vmatpush.msra.mxu0 0.0
    %370 = vmatpush.msra.mxu0 0.0
    %371 = vmatpush.msra.mxu0 0.0
    %372 = vmatpush.msra.mxu0 0.0
    %373 = vmatpush.msra.mxu0 0.0
    %374 = vmatpush.msra.mxu0 0.0
    %375 = vmatpush.msra.mxu0 0.0
    %376 = vmatpush.msra.mxu0 0.0
    %377 = vmatpush.msra.mxu0 0.0
    %378 = vmatpush.msra.mxu0 0.0
    %379 = vmatpush.msra.mxu0 0.0
    %380 = vmatpush.msra.mxu0 0.0
    %381 = vmatpush.msra.mxu0 %v116
    %382 = vmatpush.msra.mxu0 %v115
    %383 = vmatpush.msra.mxu0 %v114
    %384 = vmatpush.msra.mxu0 %v113
    %385 = vmatmul.f32.gmra.mxu0 %v367
    %v386 = vpop.f32.mrf.mxu0
    %v387 = vadd.f32 0.0, %v386
    %388 = vdwg.mxu0
    %v390 = vrot.slane %v387, 2
    %v392 = vadd.f32 %v148, %v390
    %v393 = vtanh.pop %v392
    %v394 = vxor.u32 %v392, 2147483648
    %v395 = vmul.f32 %v394, 1.442695
    %v396 = vpow.pop %v395
    %v397 = vadd.f32 %v396, 1.0
    %v398 = vrcp.pop %v397
    %v399 = vmul.f32 %v397, %v398
    %v400 = vsub.f32 1.0, %v399
    %v401 = vmul.f32 %v398, %v400
    %v402 = vadd.f32 %v398, %v401
    %vm403 = vweird.f32 %v397
    %vm404 = vweird.f32 %v398
    %vm405 = vmor %vm403, %vm404
    %v406 = vsel %vm405, %v398, %v402
    %v407 = vand.u32 2147483647, %v397
    %vm408 = vcmp.eq.f32.partialorder %v407, 8.507059e+37
    %v409 = vand.u32 %v397, 2147483648
    %v410 = vor.u32 1.1754944e-38, %v409
    %v411 = vsel %vm408, %v410, %v406
    %v412 = vmul.f32 1.0, %v411
    %v413 = vsel %vm110, %v393, %v412
    %v415 = vrot.slane %v356, 6
    %v417 = vmul.f32 %v413, %v415
    %419 = vrot.lane.b32.xlu0 %v413, 64
    %v420 = vpop.permute.xlu0 %419
    %v422 = vmul.f32 %v413, %v420
    %424 = vrot.lane.b32.xlu0 %v422, 32
    %v425 = vpop.permute.xlu0 %424
    %v427 = vadd.f32 %v417, %v425
    %v428 = vtanh.pop %v427
    %430 = vrot.lane.b32.xlu0 %v428, 64
    %v431 = vpop.permute.xlu0 %430
    %v433 = vmul.f32 %v413, %v431
    %v435 = vrot.slane %v433, 6
    %436 = vrot.lane.b32.xlu0 %v435, 32
    %v437 = vpop.permute.xlu0 %436
    %v438 = vsel %vm155, %v437, 0
    %440 = vmatpush.msra.mxu0 0.0
    %441 = vmatpush.msra.mxu0 0.0
    %442 = vmatpush.msra.mxu0 0.0
    %443 = vmatpush.msra.mxu0 0.0
    %444 = vmatpush.msra.mxu0 0.0
    %445 = vmatpush.msra.mxu0 0.0
    %446 = vmatpush.msra.mxu0 0.0
    %447 = vmatpush.msra.mxu0 0.0
    %448 = vmatpush.msra.mxu0 0.0
    %449 = vmatpush.msra.mxu0 0.0
    %450 = vmatpush.msra.mxu0 0.0
    %451 = vmatpush.msra.mxu0 0.0
    %452 = vmatpush.msra.mxu0 %v116
    %453 = vmatpush.msra.mxu0 %v115
    %454 = vmatpush.msra.mxu0 %v114
    %455 = vmatpush.msra.mxu0 %v113
    %456 = vmatmul.f32.gmra.mxu0 %v438
    %v457 = vpop.f32.mrf.mxu0
    %v458 = vadd.f32 0.0, %v457
    %459 = vdwg.mxu0
    %v460 = vadd.f32 %v151, %v458
    %v461 = vtanh.pop %v460
    %v462 = vxor.u32 %v460, 2147483648
    %v463 = vmul.f32 %v462, 1.442695
    %v464 = vpow.pop %v463
    %v465 = vadd.f32 %v464, 1.0
    %v466 = vrcp.pop %v465
    %v467 = vmul.f32 %v465, %v466
    %v468 = vsub.f32 1.0, %v467
    %v469 = vmul.f32 %v466, %v468
    %v470 = vadd.f32 %v466, %v469
    %vm471 = vweird.f32 %v465
    %vm472 = vweird.f32 %v466
    %vm473 = vmor %vm471, %vm472
    %v474 = vsel %vm473, %v466, %v470
    %v475 = vand.u32 2147483647, %v465
    %vm476 = vcmp.eq.f32.partialorder %v475, 8.507059e+37
    %v477 = vand.u32 %v465, 2147483648
    %v478 = vor.u32 1.1754944e-38, %v477
    %v479 = vsel %vm476, %v478, %v474
    %v480 = vmul.f32 1.0, %v479
    %v481 = vsel %vm110, %v461, %v480
    %v483 = vrot.slane %v427, 6
    %v485 = vmul.f32 %v481, %v483
    %487 = vrot.lane.b32.xlu0 %v481, 64
    %v488 = vpop.permute.xlu0 %487
    %v490 = vmul.f32 %v481, %v488
    %492 = vrot.lane.b32.xlu0 %v490, 32
    %v493 = vpop.permute.xlu0 %492
    %v495 = vadd.f32 %v485, %v493
    %v496 = vtanh.pop %v495
    %498 = vrot.lane.b32.xlu0 %v496, 64
    %v499 = vpop.permute.xlu0 %498
    %v501 = vmul.f32 %v481, %v499
    %503 = vrot.lane.b32.xlu0 %v501, 32
    %v504 = vpop.permute.xlu0 %503
    %v505 = vsel %vm155, %v504, 0
    %507 = vmatpush.msra.mxu0 0.0
    %508 = vmatpush.msra.mxu0 0.0
    %509 = vmatpush.msra.mxu0 0.0
    %510 = vmatpush.msra.mxu0 0.0
    %511 = vmatpush.msra.mxu0 0.0
    %512 = vmatpush.msra.mxu0 0.0
    %513 = vmatpush.msra.mxu0 0.0
    %514 = vmatpush.msra.mxu0 0.0
    %515 = vmatpush.msra.mxu0 0.0
    %516 = vmatpush.msra.mxu0 0.0
    %517 = vmatpush.msra.mxu0 0.0
    %518 = vmatpush.msra.mxu0 0.0
    %519 = vmatpush.msra.mxu0 %v116
    %520 = vmatpush.msra.mxu0 %v115
    %521 = vmatpush.msra.mxu0 %v114
    %522 = vmatpush.msra.mxu0 %v113
    %523 = vmatmul.f32.gmra.mxu0 %v505
    %v524 = vpop.f32.mrf.mxu0
    %v525 = vadd.f32 0.0, %v524
    %526 = vdwg.mxu0
    %v528 = vrot.slane %v525, 6
    %v530 = vadd.f32 %v151, %v528
    %v531 = vtanh.pop %v530
    %v532 = vxor.u32 %v530, 2147483648
    %v533 = vmul.f32 %v532, 1.442695
    %v534 = vpow.pop %v533
    %v535 = vadd.f32 %v534, 1.0
    %v536 = vrcp.pop %v535
    %v537 = vmul.f32 %v535, %v536
    %v538 = vsub.f32 1.0, %v537
    %v539 = vmul.f32 %v536, %v538
    %v540 = vadd.f32 %v536, %v539
    %vm541 = vweird.f32 %v535
    %vm542 = vweird.f32 %v536
    %vm543 = vmor %vm541, %vm542
    %v544 = vsel %vm543, %v536, %v540
    %v545 = vand.u32 2147483647, %v535
    %vm546 = vcmp.eq.f32.partialorder %v545, 8.507059e+37
    %v547 = vand.u32 %v535, 2147483648
    %v548 = vor.u32 1.1754944e-38, %v547
    %v549 = vsel %vm546, %v548, %v544
    %v550 = vmul.f32 1.0, %v549
    %v551 = vsel %vm110, %v531, %v550
    %v553 = vrot.slane %v495, 6
    %v555 = vmul.f32 %v551, %v553
    %557 = vrot.lane.b32.xlu0 %v551, 64
    %v558 = vpop.permute.xlu0 %557
    %v560 = vmul.f32 %v551, %v558
    %562 = vrot.lane.b32.xlu0 %v560, 32
    %v563 = vpop.permute.xlu0 %562
    %v565 = vadd.f32 %v555, %v563
    %v566 = vtanh.pop %v565
    %568 = vrot.lane.b32.xlu0 %v566, 64
    %v569 = vpop.permute.xlu0 %568
    %v571 = vmul.f32 %v551, %v569
    %v573 = vrot.slane %v571, 2
    %574 = vrot.lane.b32.xlu0 %v573, 32
    %v575 = vpop.permute.xlu0 %574
    %v576 = vsel %vm155, %v575, 0
    %578 = vmatpush.msra.mxu0 0.0
    %579 = vmatpush.msra.mxu0 0.0
    %580 = vmatpush.msra.mxu0 0.0
    %581 = vmatpush.msra.mxu0 0.0
    %582 = vmatpush.msra.mxu0 0.0
    %583 = vmatpush.msra.mxu0 0.0
    %584 = vmatpush.msra.mxu0 0.0
    %585 = vmatpush.msra.mxu0 0.0
    %586 = vmatpush.msra.mxu0 0.0
    %587 = vmatpush.msra.mxu0 0.0
    %588 = vmatpush.msra.mxu0 0.0
    %589 = vmatpush.msra.mxu0 0.0
    %590 = vmatpush.msra.mxu0 %v116
    %591 = vmatpush.msra.mxu0 %v115
    %592 = vmatpush.msra.mxu0 %v114
    %593 = vmatpush.msra.mxu0 %v113
    %594 = vmatmul.f32.gmra.mxu0 %v576
    %v595 = vpop.f32.mrf.mxu0
    %v596 = vadd.f32 0.0, %v595
    %597 = vdwg.mxu0
    %v599 = vrot.slane %v596, 4
    %v601 = vadd.f32 %v151, %v599
    %v602 = vtanh.pop %v601
    %v603 = vxor.u32 %v601, 2147483648
    %v604 = vmul.f32 %v603, 1.442695
    %v605 = vpow.pop %v604
    %v606 = vadd.f32 %v605, 1.0
    %v607 = vrcp.pop %v606
    %v608 = vmul.f32 %v606, %v607
    %v609 = vsub.f32 1.0, %v608
    %v610 = vmul.f32 %v607, %v609
    %v611 = vadd.f32 %v607, %v610
    %vm612 = vweird.f32 %v606
    %vm613 = vweird.f32 %v607
    %vm614 = vmor %vm612, %vm613
    %v615 = vsel %vm614, %v607, %v611
    %v616 = vand.u32 2147483647, %v606
    %vm617 = vcmp.eq.f32.partialorder %v616, 8.507059e+37
    %v618 = vand.u32 %v606, 2147483648
    %v619 = vor.u32 1.1754944e-38, %v618
    %v620 = vsel %vm617, %v619, %v615
    %v621 = vmul.f32 1.0, %v620
    %v622 = vsel %vm110, %v602, %v621
    %v624 = vrot.slane %v565, 6
    %v626 = vmul.f32 %v622, %v624
    %628 = vrot.lane.b32.xlu0 %v622, 64
    %v629 = vpop.permute.xlu0 %628
    %v631 = vmul.f32 %v622, %v629
    %633 = vrot.lane.b32.xlu0 %v631, 32
    %v634 = vpop.permute.xlu0 %633
    %v636 = vadd.f32 %v626, %v634
    %v637 = vtanh.pop %v636
    %639 = vrot.lane.b32.xlu0 %v637, 64
    %v640 = vpop.permute.xlu0 %639
    %v642 = vmul.f32 %v622, %v640
    %v644 = vrot.slane %v642, 4
    %645 = vrot.lane.b32.xlu0 %v644, 32
    %v646 = vpop.permute.xlu0 %645
    %v647 = vsel %vm155, %v646, 0
    %649 = vmatpush.msra.mxu0 0.0
    %650 = vmatpush.msra.mxu0 0.0
    %651 = vmatpush.msra.mxu0 0.0
    %652 = vmatpush.msra.mxu0 0.0
    %653 = vmatpush.msra.mxu0 0.0
    %654 = vmatpush.msra.mxu0 0.0
    %655 = vmatpush.msra.mxu0 0.0
    %656 = vmatpush.msra.mxu0 0.0
    %657 = vmatpush.msra.mxu0 0.0
    %658 = vmatpush.msra.mxu0 0.0
    %659 = vmatpush.msra.mxu0 0.0
    %660 = vmatpush.msra.mxu0 0.0
    %661 = vmatpush.msra.mxu0 %v116
    %662 = vmatpush.msra.mxu0 %v115
    %663 = vmatpush.msra.mxu0 %v114
    %664 = vmatpush.msra.mxu0 %v113
    %665 = vmatmul.f32.gmra.mxu0 %v647
    %v666 = vpop.f32.mrf.mxu0
    %v667 = vadd.f32 0.0, %v666
    %668 = vdwg.mxu0
    %v670 = vrot.slane %v667, 2
    %v672 = vadd.f32 %v151, %v670
    %v673 = vtanh.pop %v672
    %v674 = vxor.u32 %v672, 2147483648
    %v675 = vmul.f32 %v674, 1.442695
    %v676 = vpow.pop %v675
    %v677 = vadd.f32 %v676, 1.0
    %v678 = vrcp.pop %v677
    %v679 = vmul.f32 %v677, %v678
    %v680 = vsub.f32 1.0, %v679
    %v681 = vmul.f32 %v678, %v680
    %v682 = vadd.f32 %v678, %v681
    %vm683 = vweird.f32 %v677
    %vm684 = vweird.f32 %v678
    %vm685 = vmor %vm683, %vm684
    %v686 = vsel %vm685, %v678, %v682
    %v687 = vand.u32 2147483647, %v677
    %vm688 = vcmp.eq.f32.partialorder %v687, 8.507059e+37
    %v689 = vand.u32 %v677, 2147483648
    %v690 = vor.u32 1.1754944e-38, %v689
    %v691 = vsel %vm688, %v690, %v686
    %v692 = vmul.f32 1.0, %v691
    %v693 = vsel %vm110, %v673, %v692
    %v695 = vrot.slane %v636, 6
    %v697 = vmul.f32 %v693, %v695
    %699 = vrot.lane.b32.xlu0 %v693, 64
    %v700 = vpop.permute.xlu0 %699
    %v702 = vmul.f32 %v693, %v700
    %704 = vrot.lane.b32.xlu0 %v702, 32
    %v705 = vpop.permute.xlu0 %704
    %v707 = vadd.f32 %v697, %v705
    %v708 = vtanh.pop %v707
    %710 = vrot.lane.b32.xlu0 %v708, 64
    %v711 = vpop.permute.xlu0 %710
    %v713 = vmul.f32 %v693, %v711
    %715 = vrot.lane.b32.xlu0 %v713, 32
    %v716 = vpop.permute.xlu0 %715
    %vm718 = vcmask 261126
    %719 = vst.msk [vmem:[#allocation11 - $0x6] sm:$0xc0] %vm718, %v716
    %721 = vrot.lane.b32.xlu0 %v707, 96
    %v722 = vpop.permute.xlu0 %721
    %724 = vst.msk [vmem:[#allocation13 - $0x6] sm:$0xc0] %vm718, %v722
    %v725 = vld [vmem:[%s6] sm:$0xff]
    %v726 = vld [vmem:[%s6 + $0x8] sm:$0xff]
    %v727 = vld [vmem:[%s6 + $0x10] sm:$0xff]
    %v728 = vld [vmem:[%s6 + $0x18] sm:$0xff]
    %v729 = vld [vmem:[#allocation8] sm:$0xff]
    %v730 = vld [vmem:[#allocation8 + $0x8] sm:$0xff]
    %v731 = vld [vmem:[#allocation8 + $0x10] sm:$0xff]
    %v732 = vld [vmem:[#allocation8 + $0x18] sm:$0xff]
    %v733 = vld [vmem:[%s8] sm:$0x1]
    %vm734 = vcmask 1041408
    %v735 = vsel %vm734, %v221, %v291
    %vm736 = vcmask 1043456
    %v737 = vsel %vm736, %v735, %v362
    %vm738 = vcmask 1045504
    %v739 = vsel %vm738, %v737, %v433
    %v740 = vsel %vm734, %v501, %v571
    %v741 = vsel %vm736, %v740, %v642
    %v742 = vsel %vm738, %v741, %v713
    %v744 = vperm.slane %v733, 0
    %748 = vrot.lane.b32.xlu0 %v739, 32
    %v749 = vpop.permute.xlu0 %748
    %750 = vrot.lane.b32.xlu0 %v742, 32
    %v751 = vpop.permute.xlu0 %750
    %v752 = vsel %vm155, %v749, 0
    %v754 = vsel %vm155, %v751, 0
    %756 = vmatpush.msra.mxu0 0.0
    %757 = vmatpush.msra.mxu0 0.0
    %758 = vmatpush.msra.mxu0 0.0
    %759 = vmatpush.msra.mxu0 0.0
    %760 = vmatpush.msra.mxu0 0.0
    %761 = vmatpush.msra.mxu0 0.0
    %762 = vmatpush.msra.mxu0 0.0
    %763 = vmatpush.msra.mxu0 0.0
    %764 = vmatpush.msra.mxu0 0.0
    %765 = vmatpush.msra.mxu0 0.0
    %766 = vmatpush.msra.mxu0 0.0
    %767 = vmatpush.msra.mxu0 0.0
    %768 = vmatpush.msra.mxu0 %v728
    %769 = vmatpush.msra.mxu0 %v727
    %770 = vmatpush.msra.mxu0 %v726
    %771 = vmatpush.msra.mxu0 %v725
    %772 = vmatmul.f32.gmra.mxu0 %v752
    %v773 = vpop.f32.mrf.mxu0
    %v774 = vadd.f32 %v744, %v773
    %775 = vmatmul.f32.gmra.mxu0 %v754
    %v776 = vpop.f32.mrf.mxu0
    %v777 = vadd.f32 %v744, %v776
    %778 = vdwg.mxu0
    %s779 = scalar_lea.vmem [#allocation2], 2
    %v780 = vld [vmem:[%s779] sm:$0x3]
    %s781 = scalar_lea.vmem [#allocation5], 2
    %v782 = vld [vmem:[%s781] sm:$0x3]
    %v784 = vsel %vm155, %v780, 0
    %786 = vmatpush.msra.mxu0 0.0
    %787 = vmatpush.msra.mxu0 0.0
    %788 = vmatpush.msra.mxu0 0.0
    %789 = vmatpush.msra.mxu0 0.0
    %790 = vmatpush.msra.mxu0 0.0
    %791 = vmatpush.msra.mxu0 0.0
    %792 = vmatpush.msra.mxu0 0.0
    %793 = vmatpush.msra.mxu0 0.0
    %794 = vmatpush.msra.mxu0 0.0
    %795 = vmatpush.msra.mxu0 0.0
    %796 = vmatpush.msra.mxu0 0.0
    %797 = vmatpush.msra.mxu0 0.0
    %798 = vmatpush.msra.mxu0 %v732
    %799 = vmatpush.msra.mxu0 %v731
    %800 = vmatpush.msra.mxu0 %v730
    %801 = vmatpush.msra.mxu0 %v729
    %802 = vmatmul.f32.gmra.mxu0 %v784
    %v803 = vpop.f32.mrf.mxu0
    %v804 = vadd.f32 0.0, %v803
    %805 = vdwg.mxu0
    %v806 = vadd.f32 %v774, %v804
    %v807 = vtanh.pop %v806
    %v808 = vxor.u32 %v806, 2147483648
    %v809 = vmul.f32 %v808, 1.442695
    %v810 = vpow.pop %v809
    %v811 = vadd.f32 %v810, 1.0
    %v812 = vrcp.pop %v811
    %v813 = vmul.f32 %v811, %v812
    %v814 = vsub.f32 1.0, %v813
    %v815 = vmul.f32 %v812, %v814
    %v816 = vadd.f32 %v812, %v815
    %vm817 = vweird.f32 %v811
    %vm818 = vweird.f32 %v812
    %vm819 = vmor %vm817, %vm818
    %v820 = vsel %vm819, %v812, %v816
    %v821 = vand.u32 2147483647, %v811
    %vm822 = vcmp.eq.f32.partialorder %v821, 8.507059e+37
    %v823 = vand.u32 %v811, 2147483648
    %v824 = vor.u32 1.1754944e-38, %v823
    %v825 = vsel %vm822, %v824, %v820
    %v826 = vmul.f32 1.0, %v825
    %v827 = vsel %vm110, %v807, %v826
    %829 = vrot.lane.b32.xlu0 %v782, 32
    %v830 = vpop.permute.xlu0 %829
    %v832 = vmul.f32 %v827, %v830
    %834 = vrot.lane.b32.xlu0 %v827, 64
    %v835 = vpop.permute.xlu0 %834
    %v837 = vmul.f32 %v827, %v835
    %839 = vrot.lane.b32.xlu0 %v837, 32
    %v840 = vpop.permute.xlu0 %839
    %v842 = vadd.f32 %v832, %v840
    %v843 = vtanh.pop %v842
    %845 = vrot.lane.b32.xlu0 %v843, 64
    %v846 = vpop.permute.xlu0 %845
    %v848 = vmul.f32 %v827, %v846
    %850 = vrot.lane.b32.xlu0 %v848, 32
    %v851 = vpop.permute.xlu0 %850
    %v852 = vsel %vm155, %v851, 0
    %854 = vmatpush.msra.mxu0 0.0
    %855 = vmatpush.msra.mxu0 0.0
    %856 = vmatpush.msra.mxu0 0.0
    %857 = vmatpush.msra.mxu0 0.0
    %858 = vmatpush.msra.mxu0 0.0
    %859 = vmatpush.msra.mxu0 0.0
    %860 = vmatpush.msra.mxu0 0.0
    %861 = vmatpush.msra.mxu0 0.0
    %862 = vmatpush.msra.mxu0 0.0
    %863 = vmatpush.msra.mxu0 0.0
    %864 = vmatpush.msra.mxu0 0.0
    %865 = vmatpush.msra.mxu0 0.0
    %866 = vmatpush.msra.mxu0 %v732
    %867 = vmatpush.msra.mxu0 %v731
    %868 = vmatpush.msra.mxu0 %v730
    %869 = vmatpush.msra.mxu0 %v729
    %870 = vmatmul.f32.gmra.mxu0 %v852
    %v871 = vpop.f32.mrf.mxu0
    %v872 = vadd.f32 0.0, %v871
    %873 = vdwg.mxu0
    %v875 = vrot.slane %v872, 6
    %v877 = vadd.f32 %v774, %v875
    %v878 = vtanh.pop %v877
    %v879 = vxor.u32 %v877, 2147483648
    %v880 = vmul.f32 %v879, 1.442695
    %v881 = vpow.pop %v880
    %v882 = vadd.f32 %v881, 1.0
    %v883 = vrcp.pop %v882
    %v884 = vmul.f32 %v882, %v883
    %v885 = vsub.f32 1.0, %v884
    %v886 = vmul.f32 %v883, %v885
    %v887 = vadd.f32 %v883, %v886
    %vm888 = vweird.f32 %v882
    %vm889 = vweird.f32 %v883
    %vm890 = vmor %vm888, %vm889
    %v891 = vsel %vm890, %v883, %v887
    %v892 = vand.u32 2147483647, %v882
    %vm893 = vcmp.eq.f32.partialorder %v892, 8.507059e+37
    %v894 = vand.u32 %v882, 2147483648
    %v895 = vor.u32 1.1754944e-38, %v894
    %v896 = vsel %vm893, %v895, %v891
    %v897 = vmul.f32 1.0, %v896
    %v898 = vsel %vm110, %v878, %v897
    %v900 = vrot.slane %v842, 6
    %v902 = vmul.f32 %v898, %v900
    %904 = vrot.lane.b32.xlu0 %v898, 64
    %v905 = vpop.permute.xlu0 %904
    %v907 = vmul.f32 %v898, %v905
    %909 = vrot.lane.b32.xlu0 %v907, 32
    %v910 = vpop.permute.xlu0 %909
    %v912 = vadd.f32 %v902, %v910
    %v913 = vtanh.pop %v912
    %915 = vrot.lane.b32.xlu0 %v913, 64
    %v916 = vpop.permute.xlu0 %915
    %v918 = vmul.f32 %v898, %v916
    %v920 = vrot.slane %v918, 2
    %921 = vrot.lane.b32.xlu0 %v920, 32
    %v922 = vpop.permute.xlu0 %921
    %v923 = vsel %vm155, %v922, 0
    %925 = vmatpush.msra.mxu0 0.0
    %926 = vmatpush.msra.mxu0 0.0
    %927 = vmatpush.msra.mxu0 0.0
    %928 = vmatpush.msra.mxu0 0.0
    %929 = vmatpush.msra.mxu0 0.0
    %930 = vmatpush.msra.mxu0 0.0
    %931 = vmatpush.msra.mxu0 0.0
    %932 = vmatpush.msra.mxu0 0.0
    %933 = vmatpush.msra.mxu0 0.0
    %934 = vmatpush.msra.mxu0 0.0
    %935 = vmatpush.msra.mxu0 0.0
    %936 = vmatpush.msra.mxu0 0.0
    %937 = vmatpush.msra.mxu0 %v732
    %938 = vmatpush.msra.mxu0 %v731
    %939 = vmatpush.msra.mxu0 %v730
    %940 = vmatpush.msra.mxu0 %v729
    %941 = vmatmul.f32.gmra.mxu0 %v923
    %v942 = vpop.f32.mrf.mxu0
    %v943 = vadd.f32 0.0, %v942
    %944 = vdwg.mxu0
    %v946 = vrot.slane %v943, 4
    %v948 = vadd.f32 %v774, %v946
    %v949 = vtanh.pop %v948
    %v950 = vxor.u32 %v948, 2147483648
    %v951 = vmul.f32 %v950, 1.442695
    %v952 = vpow.pop %v951
    %v953 = vadd.f32 %v952, 1.0
    %v954 = vrcp.pop %v953
    %v955 = vmul.f32 %v953, %v954
    %v956 = vsub.f32 1.0, %v955
    %v957 = vmul.f32 %v954, %v956
    %v958 = vadd.f32 %v954, %v957
    %vm959 = vweird.f32 %v953
    %vm960 = vweird.f32 %v954
    %vm961 = vmor %vm959, %vm960
    %v962 = vsel %vm961, %v954, %v958
    %v963 = vand.u32 2147483647, %v953
    %vm964 = vcmp.eq.f32.partialorder %v963, 8.507059e+37
    %v965 = vand.u32 %v953, 2147483648
    %v966 = vor.u32 1.1754944e-38, %v965
    %v967 = vsel %vm964, %v966, %v962
    %v968 = vmul.f32 1.0, %v967
    %v969 = vsel %vm110, %v949, %v968
    %v971 = vrot.slane %v912, 6
    %v973 = vmul.f32 %v969, %v971
    %975 = vrot.lane.b32.xlu0 %v969, 64
    %v976 = vpop.permute.xlu0 %975
    %v978 = vmul.f32 %v969, %v976
    %980 = vrot.lane.b32.xlu0 %v978, 32
    %v981 = vpop.permute.xlu0 %980
    %v983 = vadd.f32 %v973, %v981
    %v984 = vtanh.pop %v983
    %986 = vrot.lane.b32.xlu0 %v984, 64
    %v987 = vpop.permute.xlu0 %986
    %v989 = vmul.f32 %v969, %v987
    %v991 = vrot.slane %v989, 4
    %992 = vrot.lane.b32.xlu0 %v991, 32
    %v993 = vpop.permute.xlu0 %992
    %v994 = vsel %vm155, %v993, 0
    %996 = vmatpush.msra.mxu0 0.0
    %997 = vmatpush.msra.mxu0 0.0
    %998 = vmatpush.msra.mxu0 0.0
    %999 = vmatpush.msra.mxu0 0.0
    %1000 = vmatpush.msra.mxu0 0.0
    %1001 = vmatpush.msra.mxu0 0.0
    %1002 = vmatpush.msra.mxu0 0.0
    %1003 = vmatpush.msra.mxu0 0.0
    %1004 = vmatpush.msra.mxu0 0.0
    %1005 = vmatpush.msra.mxu0 0.0
    %1006 = vmatpush.msra.mxu0 0.0
    %1007 = vmatpush.msra.mxu0 0.0
    %1008 = vmatpush.msra.mxu0 %v732
    %1009 = vmatpush.msra.mxu0 %v731
    %1010 = vmatpush.msra.mxu0 %v730
    %1011 = vmatpush.msra.mxu0 %v729
    %1012 = vmatmul.f32.gmra.mxu0 %v994
    %v1013 = vpop.f32.mrf.mxu0
    %v1014 = vadd.f32 0.0, %v1013
    %1015 = vdwg.mxu0
    %v1017 = vrot.slane %v1014, 2
    %v1019 = vadd.f32 %v774, %v1017
    %v1020 = vtanh.pop %v1019
    %v1021 = vxor.u32 %v1019, 2147483648
    %v1022 = vmul.f32 %v1021, 1.442695
    %v1023 = vpow.pop %v1022
    %v1024 = vadd.f32 %v1023, 1.0
    %v1025 = vrcp.pop %v1024
    %v1026 = vmul.f32 %v1024, %v1025
    %v1027 = vsub.f32 1.0, %v1026
    %v1028 = vmul.f32 %v1025, %v1027
    %v1029 = vadd.f32 %v1025, %v1028
    %vm1030 = vweird.f32 %v1024
    %vm1031 = vweird.f32 %v1025
    %vm1032 = vmor %vm1030, %vm1031
    %v1033 = vsel %vm1032, %v1025, %v1029
    %v1034 = vand.u32 2147483647, %v1024
    %vm1035 = vcmp.eq.f32.partialorder %v1034, 8.507059e+37
    %v1036 = vand.u32 %v1024, 2147483648
    %v1037 = vor.u32 1.1754944e-38, %v1036
    %v1038 = vsel %vm1035, %v1037, %v1033
    %v1039 = vmul.f32 1.0, %v1038
    %v1040 = vsel %vm110, %v1020, %v1039
    %v1042 = vrot.slane %v983, 6
    %v1044 = vmul.f32 %v1040, %v1042
    %1046 = vrot.lane.b32.xlu0 %v1040, 64
    %v1047 = vpop.permute.xlu0 %1046
    %v1049 = vmul.f32 %v1040, %v1047
    %1051 = vrot.lane.b32.xlu0 %v1049, 32
    %v1052 = vpop.permute.xlu0 %1051
    %v1054 = vadd.f32 %v1044, %v1052
    %v1055 = vtanh.pop %v1054
    %1057 = vrot.lane.b32.xlu0 %v1055, 64
    %v1058 = vpop.permute.xlu0 %1057
    %v1060 = vmul.f32 %v1040, %v1058
    %v1062 = vrot.slane %v1060, 6
    %1063 = vrot.lane.b32.xlu0 %v1062, 32
    %v1064 = vpop.permute.xlu0 %1063
    %v1065 = vsel %vm155, %v1064, 0
    %1067 = vmatpush.msra.mxu0 0.0
    %1068 = vmatpush.msra.mxu0 0.0
    %1069 = vmatpush.msra.mxu0 0.0
    %1070 = vmatpush.msra.mxu0 0.0
    %1071 = vmatpush.msra.mxu0 0.0
    %1072 = vmatpush.msra.mxu0 0.0
    %1073 = vmatpush.msra.mxu0 0.0
    %1074 = vmatpush.msra.mxu0 0.0
    %1075 = vmatpush.msra.mxu0 0.0
    %1076 = vmatpush.msra.mxu0 0.0
    %1077 = vmatpush.msra.mxu0 0.0
    %1078 = vmatpush.msra.mxu0 0.0
    %1079 = vmatpush.msra.mxu0 %v732
    %1080 = vmatpush.msra.mxu0 %v731
    %1081 = vmatpush.msra.mxu0 %v730
    %1082 = vmatpush.msra.mxu0 %v729
    %1083 = vmatmul.f32.gmra.mxu0 %v1065
    %v1084 = vpop.f32.mrf.mxu0
    %v1085 = vadd.f32 0.0, %v1084
    %1086 = vdwg.mxu0
    %v1087 = vadd.f32 %v777, %v1085
    %v1088 = vtanh.pop %v1087
    %v1089 = vxor.u32 %v1087, 2147483648
    %v1090 = vmul.f32 %v1089, 1.442695
    %v1091 = vpow.pop %v1090
    %v1092 = vadd.f32 %v1091, 1.0
    %v1093 = vrcp.pop %v1092
    %v1094 = vmul.f32 %v1092, %v1093
    %v1095 = vsub.f32 1.0, %v1094
    %v1096 = vmul.f32 %v1093, %v1095
    %v1097 = vadd.f32 %v1093, %v1096
    %vm1098 = vweird.f32 %v1092
    %vm1099 = vweird.f32 %v1093
    %vm1100 = vmor %vm1098, %vm1099
    %v1101 = vsel %vm1100, %v1093, %v1097
    %v1102 = vand.u32 2147483647, %v1092
    %vm1103 = vcmp.eq.f32.partialorder %v1102, 8.507059e+37
    %v1104 = vand.u32 %v1092, 2147483648
    %v1105 = vor.u32 1.1754944e-38, %v1104
    %v1106 = vsel %vm1103, %v1105, %v1101
    %v1107 = vmul.f32 1.0, %v1106
    %v1108 = vsel %vm110, %v1088, %v1107
    %v1110 = vrot.slane %v1054, 6
    %v1112 = vmul.f32 %v1108, %v1110
    %1114 = vrot.lane.b32.xlu0 %v1108, 64
    %v1115 = vpop.permute.xlu0 %1114
    %v1117 = vmul.f32 %v1108, %v1115
    %1119 = vrot.lane.b32.xlu0 %v1117, 32
    %v1120 = vpop.permute.xlu0 %1119
    %v1122 = vadd.f32 %v1112, %v1120
    %v1123 = vtanh.pop %v1122
    %1125 = vrot.lane.b32.xlu0 %v1123, 64
    %v1126 = vpop.permute.xlu0 %1125
    %v1128 = vmul.f32 %v1108, %v1126
    %1130 = vrot.lane.b32.xlu0 %v1128, 32
    %v1131 = vpop.permute.xlu0 %1130
    %v1132 = vsel %vm155, %v1131, 0
    %1134 = vmatpush.msra.mxu0 0.0
    %1135 = vmatpush.msra.mxu0 0.0
    %1136 = vmatpush.msra.mxu0 0.0
    %1137 = vmatpush.msra.mxu0 0.0
    %1138 = vmatpush.msra.mxu0 0.0
    %1139 = vmatpush.msra.mxu0 0.0
    %1140 = vmatpush.msra.mxu0 0.0
    %1141 = vmatpush.msra.mxu0 0.0
    %1142 = vmatpush.msra.mxu0 0.0
    %1143 = vmatpush.msra.mxu0 0.0
    %1144 = vmatpush.msra.mxu0 0.0
    %1145 = vmatpush.msra.mxu0 0.0
    %1146 = vmatpush.msra.mxu0 %v732
    %1147 = vmatpush.msra.mxu0 %v731
    %1148 = vmatpush.msra.mxu0 %v730
    %1149 = vmatpush.msra.mxu0 %v729
    %1150 = vmatmul.f32.gmra.mxu0 %v1132
    %v1151 = vpop.f32.mrf.mxu0
    %v1152 = vadd.f32 0.0, %v1151
    %1153 = vdwg.mxu0
    %v1155 = vrot.slane %v1152, 6
    %v1157 = vadd.f32 %v777, %v1155
    %v1158 = vtanh.pop %v1157
    %v1159 = vxor.u32 %v1157, 2147483648
    %v1160 = vmul.f32 %v1159, 1.442695
    %v1161 = vpow.pop %v1160
    %v1162 = vadd.f32 %v1161, 1.0
    %v1163 = vrcp.pop %v1162
    %v1164 = vmul.f32 %v1162, %v1163
    %v1165 = vsub.f32 1.0, %v1164
    %v1166 = vmul.f32 %v1163, %v1165
    %v1167 = vadd.f32 %v1163, %v1166
    %vm1168 = vweird.f32 %v1162
    %vm1169 = vweird.f32 %v1163
    %vm1170 = vmor %vm1168, %vm1169
    %v1171 = vsel %vm1170, %v1163, %v1167
    %v1172 = vand.u32 2147483647, %v1162
    %vm1173 = vcmp.eq.f32.partialorder %v1172, 8.507059e+37
    %v1174 = vand.u32 %v1162, 2147483648
    %v1175 = vor.u32 1.1754944e-38, %v1174
    %v1176 = vsel %vm1173, %v1175, %v1171
    %v1177 = vmul.f32 1.0, %v1176
    %v1178 = vsel %vm110, %v1158, %v1177
    %v1180 = vrot.slane %v1122, 6
    %v1182 = vmul.f32 %v1178, %v1180
    %1184 = vrot.lane.b32.xlu0 %v1178, 64
    %v1185 = vpop.permute.xlu0 %1184
    %v1187 = vmul.f32 %v1178, %v1185
    %1189 = vrot.lane.b32.xlu0 %v1187, 32
    %v1190 = vpop.permute.xlu0 %1189
    %v1192 = vadd.f32 %v1182, %v1190
    %v1193 = vtanh.pop %v1192
    %1195 = vrot.lane.b32.xlu0 %v1193, 64
    %v1196 = vpop.permute.xlu0 %1195
    %v1198 = vmul.f32 %v1178, %v1196
    %v1200 = vrot.slane %v1198, 2
    %1201 = vrot.lane.b32.xlu0 %v1200, 32
    %v1202 = vpop.permute.xlu0 %1201
    %v1203 = vsel %vm155, %v1202, 0
    %1205 = vmatpush.msra.mxu0 0.0
    %1206 = vmatpush.msra.mxu0 0.0
    %1207 = vmatpush.msra.mxu0 0.0
    %1208 = vmatpush.msra.mxu0 0.0
    %1209 = vmatpush.msra.mxu0 0.0
    %1210 = vmatpush.msra.mxu0 0.0
    %1211 = vmatpush.msra.mxu0 0.0
    %1212 = vmatpush.msra.mxu0 0.0
    %1213 = vmatpush.msra.mxu0 0.0
    %1214 = vmatpush.msra.mxu0 0.0
    %1215 = vmatpush.msra.mxu0 0.0
    %1216 = vmatpush.msra.mxu0 0.0
    %1217 = vmatpush.msra.mxu0 %v732
    %1218 = vmatpush.msra.mxu0 %v731
    %1219 = vmatpush.msra.mxu0 %v730
    %1220 = vmatpush.msra.mxu0 %v729
    %1221 = vmatmul.f32.gmra.mxu0 %v1203
    %v1222 = vpop.f32.mrf.mxu0
    %v1223 = vadd.f32 0.0, %v1222
    %1224 = vdwg.mxu0
    %v1226 = vrot.slane %v1223, 4
    %v1228 = vadd.f32 %v777, %v1226
    %v1229 = vtanh.pop %v1228
    %v1230 = vxor.u32 %v1228, 2147483648
    %v1231 = vmul.f32 %v1230, 1.442695
    %v1232 = vpow.pop %v1231
    %v1233 = vadd.f32 %v1232, 1.0
    %v1234 = vrcp.pop %v1233
    %v1235 = vmul.f32 %v1233, %v1234
    %v1236 = vsub.f32 1.0, %v1235
    %v1237 = vmul.f32 %v1234, %v1236
    %v1238 = vadd.f32 %v1234, %v1237
    %vm1239 = vweird.f32 %v1233
    %vm1240 = vweird.f32 %v1234
    %vm1241 = vmor %vm1239, %vm1240
    %v1242 = vsel %vm1241, %v1234, %v1238
    %v1243 = vand.u32 2147483647, %v1233
    %vm1244 = vcmp.eq.f32.partialorder %v1243, 8.507059e+37
    %v1245 = vand.u32 %v1233, 2147483648
    %v1246 = vor.u32 1.1754944e-38, %v1245
    %v1247 = vsel %vm1244, %v1246, %v1242
    %v1248 = vmul.f32 1.0, %v1247
    %v1249 = vsel %vm110, %v1229, %v1248
    %v1251 = vrot.slane %v1192, 6
    %v1253 = vmul.f32 %v1249, %v1251
    %1255 = vrot.lane.b32.xlu0 %v1249, 64
    %v1256 = vpop.permute.xlu0 %1255
    %v1258 = vmul.f32 %v1249, %v1256
    %1260 = vrot.lane.b32.xlu0 %v1258, 32
    %v1261 = vpop.permute.xlu0 %1260
    %v1263 = vadd.f32 %v1253, %v1261
    %v1264 = vtanh.pop %v1263
    %1266 = vrot.lane.b32.xlu0 %v1264, 64
    %v1267 = vpop.permute.xlu0 %1266
    %v1269 = vmul.f32 %v1249, %v1267
    %v1271 = vrot.slane %v1269, 4
    %1272 = vrot.lane.b32.xlu0 %v1271, 32
    %v1273 = vpop.permute.xlu0 %1272
    %v1274 = vsel %vm155, %v1273, 0
    %1276 = vmatpush.msra.mxu0 0.0
    %1277 = vmatpush.msra.mxu0 0.0
    %1278 = vmatpush.msra.mxu0 0.0
    %1279 = vmatpush.msra.mxu0 0.0
    %1280 = vmatpush.msra.mxu0 0.0
    %1281 = vmatpush.msra.mxu0 0.0
    %1282 = vmatpush.msra.mxu0 0.0
    %1283 = vmatpush.msra.mxu0 0.0
    %1284 = vmatpush.msra.mxu0 0.0
    %1285 = vmatpush.msra.mxu0 0.0
    %1286 = vmatpush.msra.mxu0 0.0
    %1287 = vmatpush.msra.mxu0 0.0
    %1288 = vmatpush.msra.mxu0 %v732
    %1289 = vmatpush.msra.mxu0 %v731
    %1290 = vmatpush.msra.mxu0 %v730
    %1291 = vmatpush.msra.mxu0 %v729
    %1292 = vmatmul.f32.gmra.mxu0 %v1274
    %v1293 = vpop.f32.mrf.mxu0
    %v1294 = vadd.f32 0.0, %v1293
    %1295 = vdwg.mxu0
    %v1297 = vrot.slane %v1294, 2
    %v1299 = vadd.f32 %v777, %v1297
    %v1300 = vtanh.pop %v1299
    %v1301 = vxor.u32 %v1299, 2147483648
    %v1302 = vmul.f32 %v1301, 1.442695
    %v1303 = vpow.pop %v1302
    %v1304 = vadd.f32 %v1303, 1.0
    %v1305 = vrcp.pop %v1304
    %v1306 = vmul.f32 %v1304, %v1305
    %v1307 = vsub.f32 1.0, %v1306
    %v1308 = vmul.f32 %v1305, %v1307
    %v1309 = vadd.f32 %v1305, %v1308
    %vm1310 = vweird.f32 %v1304
    %vm1311 = vweird.f32 %v1305
    %vm1312 = vmor %vm1310, %vm1311
    %v1313 = vsel %vm1312, %v1305, %v1309
    %v1314 = vand.u32 2147483647, %v1304
    %vm1315 = vcmp.eq.f32.partialorder %v1314, 8.507059e+37
    %v1316 = vand.u32 %v1304, 2147483648
    %v1317 = vor.u32 1.1754944e-38, %v1316
    %v1318 = vsel %vm1315, %v1317, %v1313
    %v1319 = vmul.f32 1.0, %v1318
    %v1320 = vsel %vm110, %v1300, %v1319
    %v1322 = vrot.slane %v1263, 6
    %v1324 = vmul.f32 %v1320, %v1322
    %1326 = vrot.lane.b32.xlu0 %v1320, 64
    %v1327 = vpop.permute.xlu0 %1326
    %v1329 = vmul.f32 %v1320, %v1327
    %1331 = vrot.lane.b32.xlu0 %v1329, 32
    %v1332 = vpop.permute.xlu0 %1331
    %v1334 = vadd.f32 %v1324, %v1332
    %v1335 = vtanh.pop %v1334
    %1337 = vrot.lane.b32.xlu0 %v1335, 64
    %v1338 = vpop.permute.xlu0 %1337
    %v1340 = vmul.f32 %v1320, %v1338
    %1342 = vrot.lane.b32.xlu0 %v1340, 32
    %v1343 = vpop.permute.xlu0 %1342
    %s1345 = scalar_lea.vmem [#allocation11], 2
    %1346 = vst.msk [vmem:[%s1345 - $0x6] sm:$0xc0] %vm718, %v1343
    %1348 = vrot.lane.b32.xlu0 %v1334, 96
    %v1349 = vpop.permute.xlu0 %1348
    %s1351 = scalar_lea.vmem [#allocation13], 2
    %1352 = vst.msk [vmem:[%s1351 - $0x6] sm:$0xc0] %vm718, %v1349
    %v1353 = vrot.slane %v848, 1
    %1355 = vst [vmem:[#allocation1] sm:$0xff] %v918
    %s1356 = scalar_lea.vmem [#allocation1], 2
    %v1357 = vld [vmem:[%s1356] ss:$9 sm:$0xff]
    %s1358 = scalar_lea.vmem [#allocation1], 3
    %v1359 = vld [vmem:[%s1358] ss:$9 sm:$0xff]
    %1360 = vst [vmem:[#allocation1] sm:$0xff] %v989
    %s1361 = scalar_lea.vmem [#allocation1], 4
    %v1362 = vld [vmem:[%s1361] ss:$9 sm:$0xff]
    %s1363 = scalar_lea.vmem [#allocation1], 5
    %v1364 = vld [vmem:[%s1363] ss:$9 sm:$0xff]
    %1365 = vst [vmem:[#allocation1] sm:$0xff] %v1060
    %s1366 = scalar_lea.vmem [#allocation1], 6
    %v1367 = vld [vmem:[%s1366] ss:$9 sm:$0xff]
    %s1368 = scalar_lea.vmem [#allocation1], 7
    %v1369 = vld [vmem:[%s1368] ss:$9 sm:$0xff]
    %v1370 = vrot.slane %v1128, 1
    %1371 = vst [vmem:[#allocation1] sm:$0xff] %v1198
    %s1372 = scalar_lea.vmem [#allocation1], 2
    %v1373 = vld [vmem:[%s1372] ss:$9 sm:$0xff]
    %s1374 = scalar_lea.vmem [#allocation1], 3
    %v1375 = vld [vmem:[%s1374] ss:$9 sm:$0xff]
    %1376 = vst [vmem:[#allocation1] sm:$0xff] %v1269
    %s1377 = scalar_lea.vmem [#allocation1], 4
    %v1378 = vld [vmem:[%s1377] ss:$9 sm:$0xff]
    %s1379 = scalar_lea.vmem [#allocation1], 5
    %v1380 = vld [vmem:[%s1379] ss:$9 sm:$0xff]
    %1381 = vst [vmem:[#allocation1] sm:$0xff] %v1340
    %s1382 = scalar_lea.vmem [#allocation1], 6
    %v1383 = vld [vmem:[%s1382] ss:$9 sm:$0xff]
    %s1384 = scalar_lea.vmem [#allocation1], 7
    %v1385 = vld [vmem:[%s1384] ss:$9 sm:$0xff]
    %v1386 = vperm.slane %v1357, 0
    %v1387 = vperm.slane %v1359, 0
    %v1390 = vperm.slane %v1362, 0
    %v1391 = vperm.slane %v1364, 0
    %v1394 = vperm.slane %v1367, 0
    %v1395 = vperm.slane %v1369, 0
    %v1398 = vperm.slane %v1128, 0
    %v1399 = vperm.slane %v1370, 0
    %v1402 = vperm.slane %v1373, 0
    %v1403 = vperm.slane %v1375, 0
    %v1406 = vperm.slane %v1378, 0
    %v1407 = vperm.slane %v1380, 0
    %v1410 = vperm.slane %v1383, 0
    %v1411 = vperm.slane %v1385, 0
    %vm1414 = vcmask 1040384
    %v1415 = vsel %vm1414, %v848, %v1386
    %v1416 = vsel %vm1414, %v1353, %v1387
    %v1417 = vsel %vm734, %v1415, %v1390
    %v1418 = vsel %vm734, %v1416, %v1391
    %vm1419 = vcmask 1042432
    %v1420 = vsel %vm1419, %v1417, %v1394
    %v1421 = vsel %vm1419, %v1418, %v1395
    %v1422 = vsel %vm736, %v1420, %v1398
    %v1423 = vsel %vm736, %v1421, %v1399
    %vm1424 = vcmask 1044480
    %v1425 = vsel %vm1424, %v1422, %v1402
    %v1426 = vsel %vm1424, %v1423, %v1403
    %v1427 = vsel %vm738, %v1425, %v1406
    %v1428 = vsel %vm738, %v1426, %v1407
    %vm1429 = vcmask 1046528
    %v1430 = vsel %vm1429, %v1427, %v1410
    %v1431 = vsel %vm1429, %v1428, %v1411
    %v1432 = vld [vmem:[%s9] sm:$0xff]
    %v1433 = vld [vmem:[%s9 + $0x8] sm:$0xff]
    %v1434 = vld [vmem:[%s9 + $0x10] sm:$0xff]
    %v1435 = vld [vmem:[%s9 + $0x18] sm:$0xff]
    %v1436 = vld [vmem:[%s10] sm:$0x1]
    %v1438 = vperm.slane %v1436, 0
    %1442 = vrot.lane.b32.xlu0 %v1430, 32
    %v1443 = vpop.permute.xlu0 %1442
    %1444 = vrot.lane.b32.xlu0 %v1431, 32
    %v1445 = vpop.permute.xlu0 %1444
    %v1446 = vsel %vm155, %v1443, 0
    %v1448 = vsel %vm155, %v1445, 0
    %1450 = vmatpush.msra.mxu0 0.0
    %1451 = vmatpush.msra.mxu0 0.0
    %1452 = vmatpush.msra.mxu0 0.0
    %1453 = vmatpush.msra.mxu0 0.0
    %1454 = vmatpush.msra.mxu0 0.0
    %1455 = vmatpush.msra.mxu0 0.0
    %1456 = vmatpush.msra.mxu0 0.0
    %1457 = vmatpush.msra.mxu0 0.0
    %1458 = vmatpush.msra.mxu0 0.0
    %1459 = vmatpush.msra.mxu0 0.0
    %1460 = vmatpush.msra.mxu0 0.0
    %1461 = vmatpush.msra.mxu0 0.0
    %1462 = vmatpush.msra.mxu0 %v1435
    %1463 = vmatpush.msra.mxu0 %v1434
    %1464 = vmatpush.msra.mxu0 %v1433
    %1465 = vmatpush.msra.mxu0 %v1432
    %1466 = vmatmul.f32.gmra.mxu0 %v1446
    %v1467 = vpop.f32.mrf.mxu0
    %v1468 = vadd.f32 %v1438, %v1467
    %1469 = vmatmul.f32.gmra.mxu0 %v1448
    %v1470 = vpop.f32.mrf.mxu0
    %v1471 = vadd.f32 %v1438, %v1470
    %1472 = vdwg.mxu0
    %1473 = vst.msk [vmem:[#allocation10] sm:$0xff] %vm123, %v1468
    %1474 = vst.msk [vmem:[#allocation10 + $0x8] sm:$0xff] %vm123, %v1471
    // Predicated region
    $region62: #{rnn_forward.1} parent=1 // pred_check
      _
    $region63: #{rnn_forward.1} parent=1 // pred_check_branch
      %1476 = sbr.rel (0) target = $region65
    $region64: #{rnn_forward.1} parent=1 // pred_region
      %1478 = vsyncadd [#allocation4], 0
      %s1479 = sshll.u32 [#allocation10], 4
      %s1480 = int_to_ptr.vmem [resolvable:$true] %s1479
      %s1481 = sshll.u32 %s11, 4
      %s1482 = int_to_ptr.hbm [resolvable:$true] %s1481
      %1487 = dma.vmem_to_hbm [thread:$0]  %s1480, 256, %s1482, [#allocation4], 128, 128, 8
    $region65: #{rnn_forward.1} parent=1 // pred_fallthru
      _
    // Predicated region
    $region66: #{rnn_forward.1} parent=1 // pred_check
      _
    $region67: #{rnn_forward.1} parent=1 // pred_check_branch
      %1489 = sbr.rel (0) target = $region69
    $region68: #{rnn_forward.1} parent=1 // pred_region
      %1491 = vsyncadd [#allocation12], 0
      %s1492 = sshll.u32 [#allocation11], 4
      %s1493 = int_to_ptr.vmem [resolvable:$true] %s1492
      %s1494 = sshll.u32 %s12, 4
      %s1495 = int_to_ptr.hbm [resolvable:$true] %s1494
      %1500 = dma.vmem_to_hbm [thread:$0]  %s1493, 64, %s1495, [#allocation12], 32, 32, 2
    $region69: #{rnn_forward.1} parent=1 // pred_fallthru
      _
    // Predicated region
    $region70: #{rnn_forward.1} parent=1 // pred_check
      _
    $region71: #{rnn_forward.1} parent=1 // pred_check_branch
      %1502 = sbr.rel (0) target = $region73
    $region72: #{rnn_forward.1} parent=1 // pred_region
      %1504 = vsyncadd [#allocation12], 0
      %s1505 = sshll.u32 [#allocation13], 4
      %s1506 = int_to_ptr.vmem [resolvable:$true] %s1505
      %s1507 = sshll.u32 %s13, 4
      %s1508 = int_to_ptr.hbm [resolvable:$true] %s1507
      %1513 = dma.vmem_to_hbm [thread:$0]  %s1506, 64, %s1508, [#allocation12], 32, 32, 2
    $region73: #{rnn_forward.1} parent=1 // pred_fallthru
      _
    // Predicated region
    $region74: #{rnn_forward.1} parent=1 // pred_check
      _
    $region75: #{rnn_forward.1} parent=1 // pred_check_branch
      %1515 = sbr.rel (0) target = $region77
    $region76: #{rnn_forward.1} parent=1 // pred_region
      %1517 = dma.done [#allocation4], 256
    $region77: #{rnn_forward.1} parent=1 // pred_fallthru
      _
    // Predicated region
    $region78: #{rnn_forward.1} parent=1 // pred_check
      _
    $region79: #{rnn_forward.1} parent=1 // pred_check_branch
      %1519 = sbr.rel (0) target = $region81
    $region80: #{rnn_forward.1} parent=1 // pred_region
      %1521 = dma.done [#allocation12], 64
    $region81: #{rnn_forward.1} parent=1 // pred_fallthru
      _
    // Predicated region
    $region82: #{rnn_forward.1} parent=1 // pred_check
      _
    $region83: #{rnn_forward.1} parent=1 // pred_check_branch
      %1523 = sbr.rel (0) target = $region85
    $region84: #{rnn_forward.1} parent=1 // pred_region
      %1525 = dma.done [#allocation12], 64
    $region85: #{rnn_forward.1} parent=1 // pred_fallthru
      _
    %1526 = vsyncpa [#allocation3], 1
    %1527 = vsyncpa [#allocation6], 1
    %1528 = vsyncpa [#allocation9], 1
    %1529 = vsyncpa [#allocation4], 1
    %1530 = vsyncpa [#allocation12], 1

</llo_original>
